<compile_context>
chip_gen: v6e
topology: v6e:2x2x1
jax: 0.10.0
libtpu: 0.0.40
codegen_flags: <defaults>
</compile_context>

<pallas_src>
import jax
import jax.numpy as jnp
from jax import lax
from jax.experimental import pallas as pl
from jax.experimental.pallas import tpu as pltpu  # noqa: F401  (kept for CompilerParams when scaling up)


# ----------------------------- fused MHA kernel -----------------------------
def _mha_fused_kernel(x_ref, wqkv_ref, wph_ref, bp_ref, o_ref):
    """Whole batch in one grid step.

    x_ref    : (B, T, C)        input tokens
    wqkv_ref : (3*nH, C, H)     stacked per-head weights [Q heads | K heads | V heads]
    wph_ref  : (nH, H, C)       output projection split per head (wp.reshape(nH, H, C))
    bp_ref   : (1, C)           output projection bias
    o_ref    : (B, T, C)        final (post-projection) output
    """
    B, T, C = x_ref.shape
    nH, H, _ = wph_ref.shape

    x = x_ref[...].reshape(B * T, C)                     # merge leading dims (tile-aligned, free)

    # Matches the PyTorch module exactly: scale by n_embed**-0.5, not head_size**-0.5.
    scale = float(C) ** -0.5

    # ---- QKV projection: one batched 3-D dot over the (q|k|v, head) group axis ----
    G = 3 * nH
    xg = jnp.broadcast_to(x, (G, B * T, C))              # broadcast along leading dim only
    qkv = jnp.einsum('gnc,gcd->gnd', xg, wqkv_ref[...],
                     preferred_element_type=jnp.float32)  # (3*nH, B*T, H)

    # (3*nH, B*T, H) -> (3, nH*B, T, H): pure leading/second-minor splits, no lane movement.
    qkv = qkv.reshape(3, nH * B, T, H)
    q, k, v = qkv[0], qkv[1], qkv[2]                      # each (nH*B, T, H)

    # ---- Causal attention, batched over (head, batch) in one contraction ----
    att = jnp.einsum('gqd,gkd->gqk', q, k,
                     preferred_element_type=jnp.float32) * scale   # (nH*B, T, T)

    row = lax.broadcasted_iota(jnp.int32, (T, T), 0)
    col = lax.broadcasted_iota(jnp.int32, (T, T), 1)
    att = jnp.where(row >= col, att, -jnp.inf)            # diagonal never masked -> no NaN rows

    # Numerically stable softmax; exact divide for parity with the reference.
    m = jnp.max(att, axis=-1, keepdims=True)
    e = jnp.exp(att - m)
    p = e / jnp.sum(e, axis=-1, keepdims=True)

    out = jnp.einsum('gqk,gkd->gqd', p, v,
                     preferred_element_type=jnp.float32)  # (nH*B, T, H)

    # ---- Output projection accumulated per head (no concat / lane relayout) ----
    out = out.reshape(nH, B * T, H)                       # leading-dim regrouping, free
    y_h = jnp.einsum('hnd,hdc->hnc', out, wph_ref[...],
                     preferred_element_type=jnp.float32)  # (nH, B*T, C)
    y = jnp.sum(y_h, axis=0) + bp_ref[...]                # (B*T, C) + (1, C)

    o_ref[...] = y.reshape(B, T, C).astype(o_ref.dtype)


# ----------------------------- one-time parameter packing -----------------------------
def pack_params(wq, wk, wv, wp, bp):
    """Pack module parameters ONCE at setup (not per forward call).

    wq/wk/wv : (n_heads, C, head_size)   per-head projections (no bias)
    wp       : (C, C)                    output projection, applied as x @ wp
    bp       : (C,)                      output projection bias
    """
    n_heads, C, H = wq.shape
    wqkv = jnp.concatenate([wq, wk, wv], axis=0)          # (3*nH, C, H)
    wph = wp.reshape(n_heads, H, C)                       # per-head rows of the projection
    bp2 = bp.reshape(1, C)
    return wqkv, wph, bp2


# ----------------------------- module forward -----------------------------
@jax.jit
def multi_head_attention(x, wqkv, wph, bp2):
    """Equivalent of MultiHeadAttention.forward (dropout = identity)."""
    B, T, C = x.shape
    three_nH, _, H = wqkv.shape
    nH = three_nH // 3

    flops = (2 * three_nH * B * T * C * H      # QKV projection
             + 2 * nH * B * T * T * H          # scores
             + 2 * nH * B * T * T * H          # att @ v
             + 2 * nH * B * T * H * C)         # output projection
    bytes_accessed = 4 * (x.size + wqkv.size + wph.size + bp2.size + B * T * C)
    cost = pl.CostEstimate(flops=flops,
                           transcendentals=nH * B * T * T,
                           bytes_accessed=bytes_accessed)

    return pl.pallas_call(
        _mha_fused_kernel,
        out_shape=jax.ShapeDtypeStruct((B, T, C), jnp.float32),
        grid=(1,),                                        # single step: whole batch fused
        in_specs=[
            pl.BlockSpec((B, T, C), lambda i: (0, 0, 0)),          # x (full block)
            pl.BlockSpec((three_nH, C, H), lambda i: (0, 0, 0)),   # stacked QKV weights
            pl.BlockSpec((nH, H, C), lambda i: (0, 0, 0)),         # per-head projection
            pl.BlockSpec((1, C), lambda i: (0, 0)),                # bias
        ],
        out_specs=pl.BlockSpec((B, T, C), lambda i: (0, 0, 0)),
        cost_estimate=cost,
    )(x, wqkv, wph, bp2)


# ----------------------------- reference (plain JAX) -----------------------------
def _reference(x, params):
    wq, wk, wv, wp, bp = params
    B, T, C = x.shape
    outs = []
    for h in range(wq.shape[0]):
        q = x @ wq[h]
        k = x @ wk[h]
        v = x @ wv[h]
        wei = (q @ jnp.swapaxes(k, -2, -1)) * (C ** -0.5)
        mask = jnp.tril(jnp.ones((T, T), bool))
        wei = jnp.where(mask, wei, -jnp.inf)
        wei = jax.nn.softmax(wei, axis=-1)
        outs.append(wei @ v)
    cat = jnp.concatenate(outs, axis=-1)
    return cat @ wp + bp


if __name__ == "__main__":
    # small config consistent with the module:
    #   block_size (T) = 8, n_embed = 32, n_heads = 4, head_size = 8, batch = 2
    B, T, C = 2, 8, 32
    n_heads, head_size = 4, 8
    assert n_heads * head_size == C

    key = jax.random.PRNGKey(0)
    kx, kq, kk, kv, kp, kb = jax.random.split(key, 6)

    x = jax.random.normal(kx, (B, T, C), dtype=jnp.float32)

    # deterministic parameter init (roughly nn.Linear-like scale)
    s_in = 1.0 / jnp.sqrt(jnp.float32(C))
    wq = jax.random.uniform(kq, (n_heads, C, head_size), jnp.float32, -s_in, s_in)
    wk = jax.random.uniform(kk, (n_heads, C, head_size), jnp.float32, -s_in, s_in)
    wv = jax.random.uniform(kv, (n_heads, C, head_size), jnp.float32, -s_in, s_in)
    wp = jax.random.uniform(kp, (C, C), jnp.float32, -s_in, s_in)
    bp = jax.random.uniform(kb, (C,), jnp.float32, -s_in, s_in)
    params = (wq, wk, wv, wp, bp)

    # Packing is a one-time setup cost, hoisted out of the per-call path.
    wqkv, wph, bp2 = jax.block_until_ready(pack_params(*params))

    out = multi_head_attention(x, wqkv, wph, bp2)
    out = jax.block_until_ready(out)

    ref = _reference(x, params)
    assert out.shape == (B, T, C)
    # Exact softmax divide in-kernel -> tight tolerance (only matmul reassociation noise).
    assert jnp.allclose(out, ref, atol=1e-5, rtol=1e-5), "mismatch vs reference"

    print("KERNEL_OK")
</pallas_src>

<mosaic_0001>
module attributes {stable_mosaic.version = 11 : i64} {
  func.func @_mha_fused_kernel(%arg0: i32, %arg1: memref<2x8x32xf32, #tpu.memory_space<vmem>>, %arg2: memref<12x32x8xf32, #tpu.memory_space<vmem>>, %arg3: memref<4x8x32xf32, #tpu.memory_space<vmem>>, %arg4: memref<1x32xf32, #tpu.memory_space<vmem>>, %arg5: memref<2x8x32xf32, #tpu.memory_space<vmem>>) attributes {dimension_semantics = [#tpu.dimension_semantics<arbitrary>], iteration_bounds = array<i64: 1>, scalar_prefetch = 0 : i64, scratch_operands = 0 : i64, tpu.core_type = #tpu.core_type<tc>, window_params = [{pipeline_mode = #tpu.pipeline_mode<synchronous>, transform_indices = @transform_0, window_bounds = array<i64: 2, 8, 32>}, {pipeline_mode = #tpu.pipeline_mode<synchronous>, transform_indices = @transform_1, window_bounds = array<i64: 12, 32, 8>}, {pipeline_mode = #tpu.pipeline_mode<synchronous>, transform_indices = @transform_2, window_bounds = array<i64: 4, 8, 32>}, {pipeline_mode = #tpu.pipeline_mode<synchronous>, transform_indices = @transform_3, window_bounds = array<i64: 1, 32>}, {pipeline_mode = #tpu.pipeline_mode<synchronous>, transform_indices = @transform_4, window_bounds = array<i64: 2, 8, 32>}]} {
    %c0 = arith.constant 0 : index
    %c0_0 = arith.constant 0 : index
    %c0_1 = arith.constant 0 : index
    %0 = vector.load %arg1[%c0, %c0_0, %c0_1] : memref<2x8x32xf32, #tpu.memory_space<vmem>>, vector<2x8x32xf32>
    %1 = vector.shape_cast %0 : vector<2x8x32xf32> to vector<16x32xf32>
    %2 = vector.shape_cast %1 : vector<16x32xf32> to vector<1x16x32xf32>
    %3 = vector.broadcast %2 : vector<1x16x32xf32> to vector<12x16x32xf32>
    %c0_2 = arith.constant 0 : index
    %c0_3 = arith.constant 0 : index
    %c0_4 = arith.constant 0 : index
    %4 = vector.load %arg2[%c0_2, %c0_3, %c0_4] : memref<12x32x8xf32, #tpu.memory_space<vmem>>, vector<12x32x8xf32>
    "tpu.trace_start"() <{level = 10 : i32, message = "gnc,gcd->gnd"}> : () -> ()
    %cst = arith.constant dense<0.000000e+00> : vector<12x16x8xf32>
    %5 = tpu.matmul %3, %4, %cst {dimension_numbers = #tpu.dot_dimension_numbers<[2], [1], [1], [2], [0, 0, 0, 1, 1, 2], [0], [0]>} : vector<12x16x32xf32>, vector<12x32x8xf32>, vector<12x16x8xf32> -> vector<12x16x8xf32>
    "tpu.trace_stop"() : () -> ()
    %6 = vector.shape_cast %5 : vector<12x16x8xf32> to vector<3x8x8x8xf32>
    %7 = vector.extract_strided_slice %6 {offsets = [0, 0, 0, 0], sizes = [1, 8, 8, 8], strides = [1, 1, 1, 1]} : vector<3x8x8x8xf32> to vector<1x8x8x8xf32>
    %8 = vector.shape_cast %7 : vector<1x8x8x8xf32> to vector<8x8x8xf32>
    %9 = vector.extract_strided_slice %6 {offsets = [1, 0, 0, 0], sizes = [1, 8, 8, 8], strides = [1, 1, 1, 1]} : vector<3x8x8x8xf32> to vector<1x8x8x8xf32>
    %10 = vector.shape_cast %9 : vector<1x8x8x8xf32> to vector<8x8x8xf32>
    %11 = vector.extract_strided_slice %6 {offsets = [2, 0, 0, 0], sizes = [1, 8, 8, 8], strides = [1, 1, 1, 1]} : vector<3x8x8x8xf32> to vector<1x8x8x8xf32>
    %12 = vector.shape_cast %11 : vector<1x8x8x8xf32> to vector<8x8x8xf32>
    "tpu.trace_start"() <{level = 10 : i32, message = "gqd,gkd->gqk"}> : () -> ()
    %cst_5 = arith.constant dense<0.000000e+00> : vector<8x8x8xf32>
    %13 = tpu.matmul %8, %10, %cst_5 {dimension_numbers = #tpu.dot_dimension_numbers<[2], [2], [1], [1], [0, 0, 0, 1, 1, 1], [0], [0]>} : vector<8x8x8xf32>, vector<8x8x8xf32>, vector<8x8x8xf32> -> vector<8x8x8xf32>
    "tpu.trace_stop"() : () -> ()
    %cst_6 = arith.constant 0.176776692 : f32
    %14 = vector.broadcast %cst_6 : f32 to vector<8x8x8xf32>
    %15 = arith.mulf %13, %14 : vector<8x8x8xf32>
    %16 = tpu.iota {dimensions = array<i32: 0>} : vector<8x8xi32>
    %17 = tpu.iota {dimensions = array<i32: 1>} : vector<8x8xi32>
    %18 = arith.cmpi sge, %16, %17 : vector<8x8xi32>
    %cst_7 = arith.constant 0xFF800000 : f32
    %19 = vector.shape_cast %18 : vector<8x8xi1> to vector<1x8x8xi1>
    %20 = vector.broadcast %19 : vector<1x8x8xi1> to vector<8x8x8xi1>
    %21 = vector.broadcast %cst_7 : f32 to vector<8x8x8xf32>
    %22 = arith.select %20, %15, %21 : vector<8x8x8xi1>, vector<8x8x8xf32>
    %cst_8 = arith.constant dense<0xFF800000> : vector<8x8xf32>
    %23 = vector.multi_reduction <maximumf>, %22, %cst_8 [2] : vector<8x8x8xf32> to vector<8x8xf32>
    %24 = vector.shape_cast %23 : vector<8x8xf32> to vector<8x8x1xf32>
    %25 = vector.broadcast %24 : vector<8x8x1xf32> to vector<8x8x8xf32>
    %26 = arith.subf %22, %25 : vector<8x8x8xf32>
    %27 = math.exp %26 : vector<8x8x8xf32>
    %cst_9 = arith.constant dense<0.000000e+00> : vector<8x8xf32>
    %28 = vector.multi_reduction <add>, %27, %cst_9 [2] : vector<8x8x8xf32> to vector<8x8xf32>
    %29 = vector.shape_cast %28 : vector<8x8xf32> to vector<8x8x1xf32>
    %30 = vector.broadcast %29 : vector<8x8x1xf32> to vector<8x8x8xf32>
    %31 = arith.divf %27, %30 : vector<8x8x8xf32>
    "tpu.trace_start"() <{level = 10 : i32, message = "gqk,gkd->gqd"}> : () -> ()
    %cst_10 = arith.constant dense<0.000000e+00> : vector<8x8x8xf32>
    %32 = tpu.matmul %31, %12, %cst_10 {dimension_numbers = #tpu.dot_dimension_numbers<[2], [1], [1], [2], [0, 0, 0, 1, 1, 2], [0], [0]>} : vector<8x8x8xf32>, vector<8x8x8xf32>, vector<8x8x8xf32> -> vector<8x8x8xf32>
    "tpu.trace_stop"() : () -> ()
    %33 = vector.shape_cast %32 : vector<8x8x8xf32> to vector<4x16x8xf32>
    %c0_11 = arith.constant 0 : index
    %c0_12 = arith.constant 0 : index
    %c0_13 = arith.constant 0 : index
    %34 = vector.load %arg3[%c0_11, %c0_12, %c0_13] : memref<4x8x32xf32, #tpu.memory_space<vmem>>, vector<4x8x32xf32>
    "tpu.trace_start"() <{level = 10 : i32, message = "hnd,hdc->hnc"}> : () -> ()
    %cst_14 = arith.constant dense<0.000000e+00> : vector<4x16x32xf32>
    %35 = tpu.matmul %33, %34, %cst_14 {dimension_numbers = #tpu.dot_dimension_numbers<[2], [1], [1], [2], [0, 0, 0, 1, 1, 2], [0], [0]>} : vector<4x16x8xf32>, vector<4x8x32xf32>, vector<4x16x32xf32> -> vector<4x16x32xf32>
    "tpu.trace_stop"() : () -> ()
    %cst_15 = arith.constant dense<0.000000e+00> : vector<16x32xf32>
    %36 = vector.multi_reduction <add>, %35, %cst_15 [0] : vector<4x16x32xf32> to vector<16x32xf32>
    %c0_16 = arith.constant 0 : index
    %c0_17 = arith.constant 0 : index
    %37 = vector.load %arg4[%c0_16, %c0_17] : memref<1x32xf32, #tpu.memory_space<vmem>>, vector<1x32xf32>
    %38 = vector.broadcast %37 : vector<1x32xf32> to vector<16x32xf32>
    %39 = arith.addf %36, %38 : vector<16x32xf32>
    %40 = vector.shape_cast %39 : vector<16x32xf32> to vector<2x8x32xf32>
    %c0_18 = arith.constant 0 : index
    %c0_19 = arith.constant 0 : index
    %c0_20 = arith.constant 0 : index
    %41 = vector.load %arg5[%c0_18, %c0_19, %c0_20] : memref<2x8x32xf32, #tpu.memory_space<vmem>>, vector<2x8x32xf32>
    tpu.vector_store %arg5[%c0_18, %c0_19, %c0_20], %40 {strides = array<i32>} : memref<2x8x32xf32, #tpu.memory_space<vmem>>, vector<2x8x32xf32>,
    return
  }
  func.func @transform_0(%arg0: i32) -> (i32, i32, i32) {
    %c0_i32 = arith.constant 0 : i32
    %c0_i32_0 = arith.constant 0 : i32
    %c0_i32_1 = arith.constant 0 : i32
    %c0_i32_2 = arith.constant 0 : i32
    return %c0_i32, %c0_i32_0, %c0_i32_1 : i32, i32, i32
  }
  func.func @transform_1(%arg0: i32) -> (i32, i32, i32) {
    %c0_i32 = arith.constant 0 : i32
    %c0_i32_0 = arith.constant 0 : i32
    %c0_i32_1 = arith.constant 0 : i32
    %c0_i32_2 = arith.constant 0 : i32
    return %c0_i32, %c0_i32_0, %c0_i32_1 : i32, i32, i32
  }
  func.func @transform_2(%arg0: i32) -> (i32, i32, i32) {
    %c0_i32 = arith.constant 0 : i32
    %c0_i32_0 = arith.constant 0 : i32
    %c0_i32_1 = arith.constant 0 : i32
    %c0_i32_2 = arith.constant 0 : i32
    return %c0_i32, %c0_i32_0, %c0_i32_1 : i32, i32, i32
  }
  func.func @transform_3(%arg0: i32) -> (i32, i32) {
    %c0_i32 = arith.constant 0 : i32
    %c0_i32_0 = arith.constant 0 : i32
    %c0_i32_1 = arith.constant 0 : i32
    return %c0_i32, %c0_i32_0 : i32, i32
  }
  func.func @transform_4(%arg0: i32) -> (i32, i32, i32) {
    %c0_i32 = arith.constant 0 : i32
    %c0_i32_0 = arith.constant 0 : i32
    %c0_i32_1 = arith.constant 0 : i32
    %c0_i32_2 = arith.constant 0 : i32
    return %c0_i32, %c0_i32_0, %c0_i32_1 : i32, i32, i32
  }
}

</mosaic_0001>

<llo_original>
// kernel: multi_head_attention.1
$region0: #{multi_head_attention.1}
  #allocation0 [shape = 'u32[]', space=smem, size = 0x4, offset = 0x4, fixed_abs, tag = 'smem constant byte address 0x4 - core index']
  #allocation1 [shape = 'u32[144,128]{1,0:T(1,128)}', space=vmem, size = 0x12000, scoped, tag = 'internal scratch']
  %s0 = inlined_call_operand.vmem [shape: f32[2,8,32], index: 0, kind: input, shape index: {}]
  %s1 = inlined_call_operand.vmem [shape: f32[12,32,8], index: 1, kind: input, shape index: {}]
  %s2 = inlined_call_operand.vmem [shape: f32[4,8,32], index: 2, kind: input, shape index: {}]
  %s3 = inlined_call_operand.vmem [shape: f32[1,32], index: 3, kind: input, shape index: {}]
  %s4 = inlined_call_operand.hbm [shape: f32[2,8,32], index: 4, kind: output, shape index: {}]
  %s5 = sld [smem:[#allocation0]]
  $region26: #{multi_head_attention.1} parent=0
    _
  %s7 = ssub.s32 1, %s5
  %s8 = scalar_select 0, %s7, %s5
  $region1: #{multi_head_attention.1} parent=0
    #allocation2 [shape = 'u8[8192]{0}', space=vmem, size = 0x2000, scoped, tag = 'output window, operand 0, single buffered']
    #allocation3 [shape = 's32[1]{0}', space=sflag, size = 0x4, scoped, tag = 'scoped memory for multi_head_attention.1']
    %9 = vsyncpa [#allocation3], 0
    // Predicated region
    $region2: #{multi_head_attention.1} parent=1 // pred_check
      _
    $region3: #{multi_head_attention.1} parent=1 // pred_check_branch
      %11 = sbr.rel (0) target = $region5
    $region4: #{multi_head_attention.1} parent=1 // pred_region
      _
    $region5: #{multi_head_attention.1} parent=1 // pred_fallthru
      _
    // Predicated region
    $region6: #{multi_head_attention.1} parent=1 // pred_check
      _
    $region7: #{multi_head_attention.1} parent=1 // pred_check_branch
      %13 = sbr.rel (0) target = $region9
    $region8: #{multi_head_attention.1} parent=1 // pred_region
      _
    $region9: #{multi_head_attention.1} parent=1 // pred_fallthru
      _
    // Predicated region
    $region10: #{multi_head_attention.1} parent=1 // pred_check
      _
    $region11: #{multi_head_attention.1} parent=1 // pred_check_branch
      %15 = sbr.rel (0) target = $region13
    $region12: #{multi_head_attention.1} parent=1 // pred_region
      _
    $region13: #{multi_head_attention.1} parent=1 // pred_fallthru
      _
    // Predicated region
    $region14: #{multi_head_attention.1} parent=1 // pred_check
      _
    $region15: #{multi_head_attention.1} parent=1 // pred_check_branch
      %17 = sbr.rel (0) target = $region17
    $region16: #{multi_head_attention.1} parent=1 // pred_region
      _
    $region17: #{multi_head_attention.1} parent=1 // pred_fallthru
      _
    %v18 = vld [vmem:[%s0] sm:$0xff]
    %v19 = vld [vmem:[%s0 + $0x8] sm:$0xff]
    %v20 = vld [vmem:[%s1] sm:$0xff]
    %v21 = vld [vmem:[%s1 + $0x8] sm:$0xff]
    %v22 = vld [vmem:[%s1 + $0x10] sm:$0xff]
    %v23 = vld [vmem:[%s1 + $0x18] sm:$0xff]
    %v24 = vld [vmem:[%s1 + $0x20] sm:$0xff]
    %v25 = vld [vmem:[%s1 + $0x28] sm:$0xff]
    %v26 = vld [vmem:[%s1 + $0x30] sm:$0xff]
    %v27 = vld [vmem:[%s1 + $0x38] sm:$0xff]
    %v28 = vld [vmem:[%s1 + $0x40] sm:$0xff]
    %v29 = vld [vmem:[%s1 + $0x48] sm:$0xff]
    %v30 = vld [vmem:[%s1 + $0x50] sm:$0xff]
    %v31 = vld [vmem:[%s1 + $0x58] sm:$0xff]
    %v32 = vld [vmem:[%s1 + $0x60] sm:$0xff]
    %v33 = vld [vmem:[%s1 + $0x68] sm:$0xff]
    %v34 = vld [vmem:[%s1 + $0x70] sm:$0xff]
    %v35 = vld [vmem:[%s1 + $0x78] sm:$0xff]
    %v36 = vld [vmem:[%s1 + $0x80] sm:$0xff]
    %v37 = vld [vmem:[%s1 + $0x88] sm:$0xff]
    %v38 = vld [vmem:[%s1 + $0x90] sm:$0xff]
    %v39 = vld [vmem:[%s1 + $0x98] sm:$0xff]
    %v40 = vld [vmem:[%s1 + $0xa0] sm:$0xff]
    %v41 = vld [vmem:[%s1 + $0xa8] sm:$0xff]
    %v42 = vld [vmem:[%s1 + $0xb0] sm:$0xff]
    %v43 = vld [vmem:[%s1 + $0xb8] sm:$0xff]
    %v44 = vld [vmem:[%s1 + $0xc0] sm:$0xff]
    %v45 = vld [vmem:[%s1 + $0xc8] sm:$0xff]
    %v46 = vld [vmem:[%s1 + $0xd0] sm:$0xff]
    %v47 = vld [vmem:[%s1 + $0xd8] sm:$0xff]
    %v48 = vld [vmem:[%s1 + $0xe0] sm:$0xff]
    %v49 = vld [vmem:[%s1 + $0xe8] sm:$0xff]
    %v50 = vld [vmem:[%s1 + $0xf0] sm:$0xff]
    %v51 = vld [vmem:[%s1 + $0xf8] sm:$0xff]
    %v52 = vld [vmem:[%s1 + $0x100] sm:$0xff]
    %v53 = vld [vmem:[%s1 + $0x108] sm:$0xff]
    %v54 = vld [vmem:[%s1 + $0x110] sm:$0xff]
    %v55 = vld [vmem:[%s1 + $0x118] sm:$0xff]
    %v56 = vld [vmem:[%s1 + $0x120] sm:$0xff]
    %v57 = vld [vmem:[%s1 + $0x128] sm:$0xff]
    %v58 = vld [vmem:[%s1 + $0x130] sm:$0xff]
    %v59 = vld [vmem:[%s1 + $0x138] sm:$0xff]
    %v60 = vld [vmem:[%s1 + $0x140] sm:$0xff]
    %v61 = vld [vmem:[%s1 + $0x148] sm:$0xff]
    %v62 = vld [vmem:[%s1 + $0x150] sm:$0xff]
    %v63 = vld [vmem:[%s1 + $0x158] sm:$0xff]
    %v64 = vld [vmem:[%s1 + $0x160] sm:$0xff]
    %v65 = vld [vmem:[%s1 + $0x168] sm:$0xff]
    %v66 = vld [vmem:[%s1 + $0x170] sm:$0xff]
    %v67 = vld [vmem:[%s1 + $0x178] sm:$0xff]
    %vm68 = vcmask 261120
    %v70 = vsel %vm68, %v18, 0
    %v73 = vsel %vm68, %v19, 0
    %75 = vmatprep.subr.mxu0 0.0
    %76 = vmatpush1.msra.mxu0 0.0
    %77 = vmatprep.subr.mxu0 0.0
    %78 = vmatpush1.msra.mxu0 0.0
    %79 = vmatprep.subr.mxu0 0.0
    %80 = vmatpush1.msra.mxu0 0.0
    %81 = vmatprep.subr.mxu0 0.0
    %82 = vmatpush1.msra.mxu0 0.0
    %83 = vmatprep.subr.mxu0 0.0
    %84 = vmatpush1.msra.mxu0 0.0
    %85 = vmatprep.subr.mxu0 0.0
    %86 = vmatpush1.msra.mxu0 0.0
    %87 = vmatprep.subr.mxu0 0.0
    %88 = vmatpush1.msra.mxu0 0.0
    %89 = vmatprep.subr.mxu0 0.0
    %90 = vmatpush1.msra.mxu0 0.0
    %91 = vmatprep.subr.mxu0 0.0
    %92 = vmatpush1.msra.mxu0 0.0
    %93 = vmatprep.subr.mxu0 0.0
    %94 = vmatpush1.msra.mxu0 0.0
    %95 = vmatprep.subr.mxu0 0.0
    %96 = vmatpush1.msra.mxu0 0.0
    %97 = vmatprep.subr.mxu0 0.0
    %98 = vmatpush1.msra.mxu0 0.0
    %99 = vmatprep.subr.mxu0 0.0
    %100 = vmatpush1.msra.mxu0 %v23
    %101 = vmatprep.subr.mxu0 0.0
    %102 = vmatpush1.msra.mxu0 %v22
    %103 = vmatprep.subr.mxu0 0.0
    %104 = vmatpush1.msra.mxu0 %v21
    %105 = vmatprep.subr.mxu0 0.0
    %106 = vmatpush1.msra.mxu0 %v20
    %107 = vmatprep.subr.mxu0 0.0
    %108 = vmatpush2.msra.mxu0 0.0
    %109 = vmatprep.subr.mxu0 0.0
    %110 = vmatpush2.msra.mxu0 0.0
    %111 = vmatprep.subr.mxu0 0.0
    %112 = vmatpush2.msra.mxu0 0.0
    %113 = vmatprep.subr.mxu0 0.0
    %114 = vmatpush2.msra.mxu0 0.0
    %115 = vmatprep.subr.mxu0 0.0
    %116 = vmatpush2.msra.mxu0 0.0
    %117 = vmatprep.subr.mxu0 0.0
    %118 = vmatpush2.msra.mxu0 0.0
    %119 = vmatprep.subr.mxu0 0.0
    %120 = vmatpush2.msra.mxu0 0.0
    %121 = vmatprep.subr.mxu0 0.0
    %122 = vmatpush2.msra.mxu0 0.0
    %123 = vmatprep.subr.mxu0 0.0
    %124 = vmatpush2.msra.mxu0 0.0
    %125 = vmatprep.subr.mxu0 0.0
    %126 = vmatpush2.msra.mxu0 0.0
    %127 = vmatprep.subr.mxu0 0.0
    %128 = vmatpush2.msra.mxu0 0.0
    %129 = vmatprep.subr.mxu0 0.0
    %130 = vmatpush2.msra.mxu0 0.0
    %131 = vmatprep.subr.mxu0 0.0
    %132 = vmatpush2.msra.mxu0 0.0
    %133 = vmatprep.subr.mxu0 0.0
    %134 = vmatpush2.msra.mxu0 0.0
    %135 = vmatprep.subr.mxu0 0.0
    %136 = vmatpush2.msra.mxu0 0.0
    %137 = vmatprep.subr.mxu0 0.0
    %138 = vmatpush2.msra.mxu0 0.0
    %139 = vmatprep.mubr.f32.mxu0 0.0
    %140 = vmatmul.mubr.f32.gmra.mxu0 %v70
    %v141 = vpop.f32.mrf.mxu0
    %v142 = vadd.f32 0.0, %v141
    %v143 = vpop.f32.mrf.mxu0
    %144 = vmatprep.mubr.f32.mxu0 0.0
    %145 = vmatmul.mubr.f32.gmra.mxu0 %v73
    %v146 = vpop.f32.mrf.mxu0
    %v147 = vadd.f32 0.0, %v146
    %v148 = vpop.f32.mrf.mxu0
    %149 = vdwg.mxu0
    %150 = vmatprep.subr.mxu0 0.0
    %151 = vmatpush1.msra.mxu0 0.0
    %152 = vmatprep.subr.mxu0 0.0
    %153 = vmatpush1.msra.mxu0 0.0
    %154 = vmatprep.subr.mxu0 0.0
    %155 = vmatpush1.msra.mxu0 0.0
    %156 = vmatprep.subr.mxu0 0.0
    %157 = vmatpush1.msra.mxu0 0.0
    %158 = vmatprep.subr.mxu0 0.0
    %159 = vmatpush1.msra.mxu0 0.0
    %160 = vmatprep.subr.mxu0 0.0
    %161 = vmatpush1.msra.mxu0 0.0
    %162 = vmatprep.subr.mxu0 0.0
    %163 = vmatpush1.msra.mxu0 0.0
    %164 = vmatprep.subr.mxu0 0.0
    %165 = vmatpush1.msra.mxu0 0.0
    %166 = vmatprep.subr.mxu0 0.0
    %167 = vmatpush1.msra.mxu0 0.0
    %168 = vmatprep.subr.mxu0 0.0
    %169 = vmatpush1.msra.mxu0 0.0
    %170 = vmatprep.subr.mxu0 0.0
    %171 = vmatpush1.msra.mxu0 0.0
    %172 = vmatprep.subr.mxu0 0.0
    %173 = vmatpush1.msra.mxu0 0.0
    %174 = vmatprep.subr.mxu0 0.0
    %175 = vmatpush1.msra.mxu0 %v27
    %176 = vmatprep.subr.mxu0 0.0
    %177 = vmatpush1.msra.mxu0 %v26
    %178 = vmatprep.subr.mxu0 0.0
    %179 = vmatpush1.msra.mxu0 %v25
    %180 = vmatprep.subr.mxu0 0.0
    %181 = vmatpush1.msra.mxu0 %v24
    %182 = vmatprep.subr.mxu0 0.0
    %183 = vmatpush2.msra.mxu0 0.0
    %184 = vmatprep.subr.mxu0 0.0
    %185 = vmatpush2.msra.mxu0 0.0
    %186 = vmatprep.subr.mxu0 0.0
    %187 = vmatpush2.msra.mxu0 0.0
    %188 = vmatprep.subr.mxu0 0.0
    %189 = vmatpush2.msra.mxu0 0.0
    %190 = vmatprep.subr.mxu0 0.0
    %191 = vmatpush2.msra.mxu0 0.0
    %192 = vmatprep.subr.mxu0 0.0
    %193 = vmatpush2.msra.mxu0 0.0
    %194 = vmatprep.subr.mxu0 0.0
    %195 = vmatpush2.msra.mxu0 0.0
    %196 = vmatprep.subr.mxu0 0.0
    %197 = vmatpush2.msra.mxu0 0.0
    %198 = vmatprep.subr.mxu0 0.0
    %199 = vmatpush2.msra.mxu0 0.0
    %200 = vmatprep.subr.mxu0 0.0
    %201 = vmatpush2.msra.mxu0 0.0
    %202 = vmatprep.subr.mxu0 0.0
    %203 = vmatpush2.msra.mxu0 0.0
    %204 = vmatprep.subr.mxu0 0.0
    %205 = vmatpush2.msra.mxu0 0.0
    %206 = vmatprep.subr.mxu0 0.0
    %207 = vmatpush2.msra.mxu0 0.0
    %208 = vmatprep.subr.mxu0 0.0
    %209 = vmatpush2.msra.mxu0 0.0
    %210 = vmatprep.subr.mxu0 0.0
    %211 = vmatpush2.msra.mxu0 0.0
    %212 = vmatprep.subr.mxu0 0.0
    %213 = vmatpush2.msra.mxu0 0.0
    %214 = vmatprep.mubr.f32.mxu0 0.0
    %215 = vmatmul.mubr.f32.gmra.mxu0 %v70
    %v216 = vpop.f32.mrf.mxu0
    %v217 = vadd.f32 0.0, %v216
    %v218 = vpop.f32.mrf.mxu0
    %219 = vmatprep.mubr.f32.mxu0 0.0
    %220 = vmatmul.mubr.f32.gmra.mxu0 %v73
    %v221 = vpop.f32.mrf.mxu0
    %v222 = vadd.f32 0.0, %v221
    %v223 = vpop.f32.mrf.mxu0
    %224 = vdwg.mxu0
    %225 = vmatprep.subr.mxu0 0.0
    %226 = vmatpush1.msra.mxu0 0.0
    %227 = vmatprep.subr.mxu0 0.0
    %228 = vmatpush1.msra.mxu0 0.0
    %229 = vmatprep.subr.mxu0 0.0
    %230 = vmatpush1.msra.mxu0 0.0
    %231 = vmatprep.subr.mxu0 0.0
    %232 = vmatpush1.msra.mxu0 0.0
    %233 = vmatprep.subr.mxu0 0.0
    %234 = vmatpush1.msra.mxu0 0.0
    %235 = vmatprep.subr.mxu0 0.0
    %236 = vmatpush1.msra.mxu0 0.0
    %237 = vmatprep.subr.mxu0 0.0
    %238 = vmatpush1.msra.mxu0 0.0
    %239 = vmatprep.subr.mxu0 0.0
    %240 = vmatpush1.msra.mxu0 0.0
    %241 = vmatprep.subr.mxu0 0.0
    %242 = vmatpush1.msra.mxu0 0.0
    %243 = vmatprep.subr.mxu0 0.0
    %244 = vmatpush1.msra.mxu0 0.0
    %245 = vmatprep.subr.mxu0 0.0
    %246 = vmatpush1.msra.mxu0 0.0
    %247 = vmatprep.subr.mxu0 0.0
    %248 = vmatpush1.msra.mxu0 0.0
    %249 = vmatprep.subr.mxu0 0.0
    %250 = vmatpush1.msra.mxu0 %v31
    %251 = vmatprep.subr.mxu0 0.0
    %252 = vmatpush1.msra.mxu0 %v30
    %253 = vmatprep.subr.mxu0 0.0
    %254 = vmatpush1.msra.mxu0 %v29
    %255 = vmatprep.subr.mxu0 0.0
    %256 = vmatpush1.msra.mxu0 %v28
    %257 = vmatprep.subr.mxu0 0.0
    %258 = vmatpush2.msra.mxu0 0.0
    %259 = vmatprep.subr.mxu0 0.0
    %260 = vmatpush2.msra.mxu0 0.0
    %261 = vmatprep.subr.mxu0 0.0
    %262 = vmatpush2.msra.mxu0 0.0
    %263 = vmatprep.subr.mxu0 0.0
    %264 = vmatpush2.msra.mxu0 0.0
    %265 = vmatprep.subr.mxu0 0.0
    %266 = vmatpush2.msra.mxu0 0.0
    %267 = vmatprep.subr.mxu0 0.0
    %268 = vmatpush2.msra.mxu0 0.0
    %269 = vmatprep.subr.mxu0 0.0
    %270 = vmatpush2.msra.mxu0 0.0
    %271 = vmatprep.subr.mxu0 0.0
    %272 = vmatpush2.msra.mxu0 0.0
    %273 = vmatprep.subr.mxu0 0.0
    %274 = vmatpush2.msra.mxu0 0.0
    %275 = vmatprep.subr.mxu0 0.0
    %276 = vmatpush2.msra.mxu0 0.0
    %277 = vmatprep.subr.mxu0 0.0
    %278 = vmatpush2.msra.mxu0 0.0
    %279 = vmatprep.subr.mxu0 0.0
    %280 = vmatpush2.msra.mxu0 0.0
    %281 = vmatprep.subr.mxu0 0.0
    %282 = vmatpush2.msra.mxu0 0.0
    %283 = vmatprep.subr.mxu0 0.0
    %284 = vmatpush2.msra.mxu0 0.0
    %285 = vmatprep.subr.mxu0 0.0
    %286 = vmatpush2.msra.mxu0 0.0
    %287 = vmatprep.subr.mxu0 0.0
    %288 = vmatpush2.msra.mxu0 0.0
    %289 = vmatprep.mubr.f32.mxu0 0.0
    %290 = vmatmul.mubr.f32.gmra.mxu0 %v70
    %v291 = vpop.f32.mrf.mxu0
    %v292 = vadd.f32 0.0, %v291
    %v293 = vpop.f32.mrf.mxu0
    %294 = vmatprep.mubr.f32.mxu0 0.0
    %295 = vmatmul.mubr.f32.gmra.mxu0 %v73
    %v296 = vpop.f32.mrf.mxu0
    %v297 = vadd.f32 0.0, %v296
    %v298 = vpop.f32.mrf.mxu0
    %299 = vdwg.mxu0
    %300 = vmatprep.subr.mxu0 0.0
    %301 = vmatpush1.msra.mxu0 0.0
    %302 = vmatprep.subr.mxu0 0.0
    %303 = vmatpush1.msra.mxu0 0.0
    %304 = vmatprep.subr.mxu0 0.0
    %305 = vmatpush1.msra.mxu0 0.0
    %306 = vmatprep.subr.mxu0 0.0
    %307 = vmatpush1.msra.mxu0 0.0
    %308 = vmatprep.subr.mxu0 0.0
    %309 = vmatpush1.msra.mxu0 0.0
    %310 = vmatprep.subr.mxu0 0.0
    %311 = vmatpush1.msra.mxu0 0.0
    %312 = vmatprep.subr.mxu0 0.0
    %313 = vmatpush1.msra.mxu0 0.0
    %314 = vmatprep.subr.mxu0 0.0
    %315 = vmatpush1.msra.mxu0 0.0
    %316 = vmatprep.subr.mxu0 0.0
    %317 = vmatpush1.msra.mxu0 0.0
    %318 = vmatprep.subr.mxu0 0.0
    %319 = vmatpush1.msra.mxu0 0.0
    %320 = vmatprep.subr.mxu0 0.0
    %321 = vmatpush1.msra.mxu0 0.0
    %322 = vmatprep.subr.mxu0 0.0
    %323 = vmatpush1.msra.mxu0 0.0
    %324 = vmatprep.subr.mxu0 0.0
    %325 = vmatpush1.msra.mxu0 %v35
    %326 = vmatprep.subr.mxu0 0.0
    %327 = vmatpush1.msra.mxu0 %v34
    %328 = vmatprep.subr.mxu0 0.0
    %329 = vmatpush1.msra.mxu0 %v33
    %330 = vmatprep.subr.mxu0 0.0
    %331 = vmatpush1.msra.mxu0 %v32
    %332 = vmatprep.subr.mxu0 0.0
    %333 = vmatpush2.msra.mxu0 0.0
    %334 = vmatprep.subr.mxu0 0.0
    %335 = vmatpush2.msra.mxu0 0.0
    %336 = vmatprep.subr.mxu0 0.0
    %337 = vmatpush2.msra.mxu0 0.0
    %338 = vmatprep.subr.mxu0 0.0
    %339 = vmatpush2.msra.mxu0 0.0
    %340 = vmatprep.subr.mxu0 0.0
    %341 = vmatpush2.msra.mxu0 0.0
    %342 = vmatprep.subr.mxu0 0.0
    %343 = vmatpush2.msra.mxu0 0.0
    %344 = vmatprep.subr.mxu0 0.0
    %345 = vmatpush2.msra.mxu0 0.0
    %346 = vmatprep.subr.mxu0 0.0
    %347 = vmatpush2.msra.mxu0 0.0
    %348 = vmatprep.subr.mxu0 0.0
    %349 = vmatpush2.msra.mxu0 0.0
    %350 = vmatprep.subr.mxu0 0.0
    %351 = vmatpush2.msra.mxu0 0.0
    %352 = vmatprep.subr.mxu0 0.0
    %353 = vmatpush2.msra.mxu0 0.0
    %354 = vmatprep.subr.mxu0 0.0
    %355 = vmatpush2.msra.mxu0 0.0
    %356 = vmatprep.subr.mxu0 0.0
    %357 = vmatpush2.msra.mxu0 0.0
    %358 = vmatprep.subr.mxu0 0.0
    %359 = vmatpush2.msra.mxu0 0.0
    %360 = vmatprep.subr.mxu0 0.0
    %361 = vmatpush2.msra.mxu0 0.0
    %362 = vmatprep.subr.mxu0 0.0
    %363 = vmatpush2.msra.mxu0 0.0
    %364 = vmatprep.mubr.f32.mxu0 0.0
    %365 = vmatmul.mubr.f32.gmra.mxu0 %v70
    %v366 = vpop.f32.mrf.mxu0
    %v367 = vadd.f32 0.0, %v366
    %v368 = vpop.f32.mrf.mxu0
    %369 = vmatprep.mubr.f32.mxu0 0.0
    %370 = vmatmul.mubr.f32.gmra.mxu0 %v73
    %v371 = vpop.f32.mrf.mxu0
    %v372 = vadd.f32 0.0, %v371
    %v373 = vpop.f32.mrf.mxu0
    %374 = vdwg.mxu0
    %375 = vmatprep.subr.mxu0 0.0
    %376 = vmatpush1.msra.mxu0 0.0
    %377 = vmatprep.subr.mxu0 0.0
    %378 = vmatpush1.msra.mxu0 0.0
    %379 = vmatprep.subr.mxu0 0.0
    %380 = vmatpush1.msra.mxu0 0.0
    %381 = vmatprep.subr.mxu0 0.0
    %382 = vmatpush1.msra.mxu0 0.0
    %383 = vmatprep.subr.mxu0 0.0
    %384 = vmatpush1.msra.mxu0 0.0
    %385 = vmatprep.subr.mxu0 0.0
    %386 = vmatpush1.msra.mxu0 0.0
    %387 = vmatprep.subr.mxu0 0.0
    %388 = vmatpush1.msra.mxu0 0.0
    %389 = vmatprep.subr.mxu0 0.0
    %390 = vmatpush1.msra.mxu0 0.0
    %391 = vmatprep.subr.mxu0 0.0
    %392 = vmatpush1.msra.mxu0 0.0
    %393 = vmatprep.subr.mxu0 0.0
    %394 = vmatpush1.msra.mxu0 0.0
    %395 = vmatprep.subr.mxu0 0.0
    %396 = vmatpush1.msra.mxu0 0.0
    %397 = vmatprep.subr.mxu0 0.0
    %398 = vmatpush1.msra.mxu0 0.0
    %399 = vmatprep.subr.mxu0 0.0
    %400 = vmatpush1.msra.mxu0 %v39
    %401 = vmatprep.subr.mxu0 0.0
    %402 = vmatpush1.msra.mxu0 %v38
    %403 = vmatprep.subr.mxu0 0.0
    %404 = vmatpush1.msra.mxu0 %v37
    %405 = vmatprep.subr.mxu0 0.0
    %406 = vmatpush1.msra.mxu0 %v36
    %407 = vmatprep.subr.mxu0 0.0
    %408 = vmatpush2.msra.mxu0 0.0
    %409 = vmatprep.subr.mxu0 0.0
    %410 = vmatpush2.msra.mxu0 0.0
    %411 = vmatprep.subr.mxu0 0.0
    %412 = vmatpush2.msra.mxu0 0.0
    %413 = vmatprep.subr.mxu0 0.0
    %414 = vmatpush2.msra.mxu0 0.0
    %415 = vmatprep.subr.mxu0 0.0
    %416 = vmatpush2.msra.mxu0 0.0
    %417 = vmatprep.subr.mxu0 0.0
    %418 = vmatpush2.msra.mxu0 0.0
    %419 = vmatprep.subr.mxu0 0.0
    %420 = vmatpush2.msra.mxu0 0.0
    %421 = vmatprep.subr.mxu0 0.0
    %422 = vmatpush2.msra.mxu0 0.0
    %423 = vmatprep.subr.mxu0 0.0
    %424 = vmatpush2.msra.mxu0 0.0
    %425 = vmatprep.subr.mxu0 0.0
    %426 = vmatpush2.msra.mxu0 0.0
    %427 = vmatprep.subr.mxu0 0.0
    %428 = vmatpush2.msra.mxu0 0.0
    %429 = vmatprep.subr.mxu0 0.0
    %430 = vmatpush2.msra.mxu0 0.0
    %431 = vmatprep.subr.mxu0 0.0
    %432 = vmatpush2.msra.mxu0 0.0
    %433 = vmatprep.subr.mxu0 0.0
    %434 = vmatpush2.msra.mxu0 0.0
    %435 = vmatprep.subr.mxu0 0.0
    %436 = vmatpush2.msra.mxu0 0.0
    %437 = vmatprep.subr.mxu0 0.0
    %438 = vmatpush2.msra.mxu0 0.0
    %439 = vmatprep.mubr.f32.mxu0 0.0
    %440 = vmatmul.mubr.f32.gmra.mxu0 %v70
    %v441 = vpop.f32.mrf.mxu0
    %v442 = vadd.f32 0.0, %v441
    %v443 = vpop.f32.mrf.mxu0
    %444 = vmatprep.mubr.f32.mxu0 0.0
    %445 = vmatmul.mubr.f32.gmra.mxu0 %v73
    %v446 = vpop.f32.mrf.mxu0
    %v447 = vadd.f32 0.0, %v446
    %v448 = vpop.f32.mrf.mxu0
    %449 = vdwg.mxu0
    %450 = vmatprep.subr.mxu0 0.0
    %451 = vmatpush1.msra.mxu0 0.0
    %452 = vmatprep.subr.mxu0 0.0
    %453 = vmatpush1.msra.mxu0 0.0
    %454 = vmatprep.subr.mxu0 0.0
    %455 = vmatpush1.msra.mxu0 0.0
    %456 = vmatprep.subr.mxu0 0.0
    %457 = vmatpush1.msra.mxu0 0.0
    %458 = vmatprep.subr.mxu0 0.0
    %459 = vmatpush1.msra.mxu0 0.0
    %460 = vmatprep.subr.mxu0 0.0
    %461 = vmatpush1.msra.mxu0 0.0
    %462 = vmatprep.subr.mxu0 0.0
    %463 = vmatpush1.msra.mxu0 0.0
    %464 = vmatprep.subr.mxu0 0.0
    %465 = vmatpush1.msra.mxu0 0.0
    %466 = vmatprep.subr.mxu0 0.0
    %467 = vmatpush1.msra.mxu0 0.0
    %468 = vmatprep.subr.mxu0 0.0
    %469 = vmatpush1.msra.mxu0 0.0
    %470 = vmatprep.subr.mxu0 0.0
    %471 = vmatpush1.msra.mxu0 0.0
    %472 = vmatprep.subr.mxu0 0.0
    %473 = vmatpush1.msra.mxu0 0.0
    %474 = vmatprep.subr.mxu0 0.0
    %475 = vmatpush1.msra.mxu0 %v43
    %476 = vmatprep.subr.mxu0 0.0
    %477 = vmatpush1.msra.mxu0 %v42
    %478 = vmatprep.subr.mxu0 0.0
    %479 = vmatpush1.msra.mxu0 %v41
    %480 = vmatprep.subr.mxu0 0.0
    %481 = vmatpush1.msra.mxu0 %v40
    %482 = vmatprep.subr.mxu0 0.0
    %483 = vmatpush2.msra.mxu0 0.0
    %484 = vmatprep.subr.mxu0 0.0
    %485 = vmatpush2.msra.mxu0 0.0
    %486 = vmatprep.subr.mxu0 0.0
    %487 = vmatpush2.msra.mxu0 0.0
    %488 = vmatprep.subr.mxu0 0.0
    %489 = vmatpush2.msra.mxu0 0.0
    %490 = vmatprep.subr.mxu0 0.0
    %491 = vmatpush2.msra.mxu0 0.0
    %492 = vmatprep.subr.mxu0 0.0
    %493 = vmatpush2.msra.mxu0 0.0
    %494 = vmatprep.subr.mxu0 0.0
    %495 = vmatpush2.msra.mxu0 0.0
    %496 = vmatprep.subr.mxu0 0.0
    %497 = vmatpush2.msra.mxu0 0.0
    %498 = vmatprep.subr.mxu0 0.0
    %499 = vmatpush2.msra.mxu0 0.0
    %500 = vmatprep.subr.mxu0 0.0
    %501 = vmatpush2.msra.mxu0 0.0
    %502 = vmatprep.subr.mxu0 0.0
    %503 = vmatpush2.msra.mxu0 0.0
    %504 = vmatprep.subr.mxu0 0.0
    %505 = vmatpush2.msra.mxu0 0.0
    %506 = vmatprep.subr.mxu0 0.0
    %507 = vmatpush2.msra.mxu0 0.0
    %508 = vmatprep.subr.mxu0 0.0
    %509 = vmatpush2.msra.mxu0 0.0
    %510 = vmatprep.subr.mxu0 0.0
    %511 = vmatpush2.msra.mxu0 0.0
    %512 = vmatprep.subr.mxu0 0.0
    %513 = vmatpush2.msra.mxu0 0.0
    %514 = vmatprep.mubr.f32.mxu0 0.0
    %515 = vmatmul.mubr.f32.gmra.mxu0 %v70
    %v516 = vpop.f32.mrf.mxu0
    %v517 = vadd.f32 0.0, %v516
    %v518 = vpop.f32.mrf.mxu0
    %519 = vmatprep.mubr.f32.mxu0 0.0
    %520 = vmatmul.mubr.f32.gmra.mxu0 %v73
    %v521 = vpop.f32.mrf.mxu0
    %v522 = vadd.f32 0.0, %v521
    %v523 = vpop.f32.mrf.mxu0
    %524 = vdwg.mxu0
    %525 = vmatprep.subr.mxu0 0.0
    %526 = vmatpush1.msra.mxu0 0.0
    %527 = vmatprep.subr.mxu0 0.0
    %528 = vmatpush1.msra.mxu0 0.0
    %529 = vmatprep.subr.mxu0 0.0
    %530 = vmatpush1.msra.mxu0 0.0
    %531 = vmatprep.subr.mxu0 0.0
    %532 = vmatpush1.msra.mxu0 0.0
    %533 = vmatprep.subr.mxu0 0.0
    %534 = vmatpush1.msra.mxu0 0.0
    %535 = vmatprep.subr.mxu0 0.0
    %536 = vmatpush1.msra.mxu0 0.0
    %537 = vmatprep.subr.mxu0 0.0
    %538 = vmatpush1.msra.mxu0 0.0
    %539 = vmatprep.subr.mxu0 0.0
    %540 = vmatpush1.msra.mxu0 0.0
    %541 = vmatprep.subr.mxu0 0.0
    %542 = vmatpush1.msra.mxu0 0.0
    %543 = vmatprep.subr.mxu0 0.0
    %544 = vmatpush1.msra.mxu0 0.0
    %545 = vmatprep.subr.mxu0 0.0
    %546 = vmatpush1.msra.mxu0 0.0
    %547 = vmatprep.subr.mxu0 0.0
    %548 = vmatpush1.msra.mxu0 0.0
    %549 = vmatprep.subr.mxu0 0.0
    %550 = vmatpush1.msra.mxu0 %v47
    %551 = vmatprep.subr.mxu0 0.0
    %552 = vmatpush1.msra.mxu0 %v46
    %553 = vmatprep.subr.mxu0 0.0
    %554 = vmatpush1.msra.mxu0 %v45
    %555 = vmatprep.subr.mxu0 0.0
    %556 = vmatpush1.msra.mxu0 %v44
    %557 = vmatprep.subr.mxu0 0.0
    %558 = vmatpush2.msra.mxu0 0.0
    %559 = vmatprep.subr.mxu0 0.0
    %560 = vmatpush2.msra.mxu0 0.0
    %561 = vmatprep.subr.mxu0 0.0
    %562 = vmatpush2.msra.mxu0 0.0
    %563 = vmatprep.subr.mxu0 0.0
    %564 = vmatpush2.msra.mxu0 0.0
    %565 = vmatprep.subr.mxu0 0.0
    %566 = vmatpush2.msra.mxu0 0.0
    %567 = vmatprep.subr.mxu0 0.0
    %568 = vmatpush2.msra.mxu0 0.0
    %569 = vmatprep.subr.mxu0 0.0
    %570 = vmatpush2.msra.mxu0 0.0
    %571 = vmatprep.subr.mxu0 0.0
    %572 = vmatpush2.msra.mxu0 0.0
    %573 = vmatprep.subr.mxu0 0.0
    %574 = vmatpush2.msra.mxu0 0.0
    %575 = vmatprep.subr.mxu0 0.0
    %576 = vmatpush2.msra.mxu0 0.0
    %577 = vmatprep.subr.mxu0 0.0
    %578 = vmatpush2.msra.mxu0 0.0
    %579 = vmatprep.subr.mxu0 0.0
    %580 = vmatpush2.msra.mxu0 0.0
    %581 = vmatprep.subr.mxu0 0.0
    %582 = vmatpush2.msra.mxu0 0.0
    %583 = vmatprep.subr.mxu0 0.0
    %584 = vmatpush2.msra.mxu0 0.0
    %585 = vmatprep.subr.mxu0 0.0
    %586 = vmatpush2.msra.mxu0 0.0
    %587 = vmatprep.subr.mxu0 0.0
    %588 = vmatpush2.msra.mxu0 0.0
    %589 = vmatprep.mubr.f32.mxu0 0.0
    %590 = vmatmul.mubr.f32.gmra.mxu0 %v70
    %v591 = vpop.f32.mrf.mxu0
    %v592 = vadd.f32 0.0, %v591
    %v593 = vpop.f32.mrf.mxu0
    %594 = vmatprep.mubr.f32.mxu0 0.0
    %595 = vmatmul.mubr.f32.gmra.mxu0 %v73
    %v596 = vpop.f32.mrf.mxu0
    %v597 = vadd.f32 0.0, %v596
    %v598 = vpop.f32.mrf.mxu0
    %599 = vdwg.mxu0
    %600 = vmatprep.subr.mxu0 0.0
    %601 = vmatpush1.msra.mxu0 0.0
    %602 = vmatprep.subr.mxu0 0.0
    %603 = vmatpush1.msra.mxu0 0.0
    %604 = vmatprep.subr.mxu0 0.0
    %605 = vmatpush1.msra.mxu0 0.0
    %606 = vmatprep.subr.mxu0 0.0
    %607 = vmatpush1.msra.mxu0 0.0
    %608 = vmatprep.subr.mxu0 0.0
    %609 = vmatpush1.msra.mxu0 0.0
    %610 = vmatprep.subr.mxu0 0.0
    %611 = vmatpush1.msra.mxu0 0.0
    %612 = vmatprep.subr.mxu0 0.0
    %613 = vmatpush1.msra.mxu0 0.0
    %614 = vmatprep.subr.mxu0 0.0
    %615 = vmatpush1.msra.mxu0 0.0
    %616 = vmatprep.subr.mxu0 0.0
    %617 = vmatpush1.msra.mxu0 0.0
    %618 = vmatprep.subr.mxu0 0.0
    %619 = vmatpush1.msra.mxu0 0.0
    %620 = vmatprep.subr.mxu0 0.0
    %621 = vmatpush1.msra.mxu0 0.0
    %622 = vmatprep.subr.mxu0 0.0
    %623 = vmatpush1.msra.mxu0 0.0
    %624 = vmatprep.subr.mxu0 0.0
    %625 = vmatpush1.msra.mxu0 %v51
    %626 = vmatprep.subr.mxu0 0.0
    %627 = vmatpush1.msra.mxu0 %v50
    %628 = vmatprep.subr.mxu0 0.0
    %629 = vmatpush1.msra.mxu0 %v49
    %630 = vmatprep.subr.mxu0 0.0
    %631 = vmatpush1.msra.mxu0 %v48
    %632 = vmatprep.subr.mxu0 0.0
    %633 = vmatpush2.msra.mxu0 0.0
    %634 = vmatprep.subr.mxu0 0.0
    %635 = vmatpush2.msra.mxu0 0.0
    %636 = vmatprep.subr.mxu0 0.0
    %637 = vmatpush2.msra.mxu0 0.0
    %638 = vmatprep.subr.mxu0 0.0
    %639 = vmatpush2.msra.mxu0 0.0
    %640 = vmatprep.subr.mxu0 0.0
    %641 = vmatpush2.msra.mxu0 0.0
    %642 = vmatprep.subr.mxu0 0.0
    %643 = vmatpush2.msra.mxu0 0.0
    %644 = vmatprep.subr.mxu0 0.0
    %645 = vmatpush2.msra.mxu0 0.0
    %646 = vmatprep.subr.mxu0 0.0
    %647 = vmatpush2.msra.mxu0 0.0
    %648 = vmatprep.subr.mxu0 0.0
    %649 = vmatpush2.msra.mxu0 0.0
    %650 = vmatprep.subr.mxu0 0.0
    %651 = vmatpush2.msra.mxu0 0.0
    %652 = vmatprep.subr.mxu0 0.0
    %653 = vmatpush2.msra.mxu0 0.0
    %654 = vmatprep.subr.mxu0 0.0
    %655 = vmatpush2.msra.mxu0 0.0
    %656 = vmatprep.subr.mxu0 0.0
    %657 = vmatpush2.msra.mxu0 0.0
    %658 = vmatprep.subr.mxu0 0.0
    %659 = vmatpush2.msra.mxu0 0.0
    %660 = vmatprep.subr.mxu0 0.0
    %661 = vmatpush2.msra.mxu0 0.0
    %662 = vmatprep.subr.mxu0 0.0
    %663 = vmatpush2.msra.mxu0 0.0
    %664 = vmatprep.mubr.f32.mxu0 0.0
    %665 = vmatmul.mubr.f32.gmra.mxu0 %v70
    %v666 = vpop.f32.mrf.mxu0
    %v667 = vadd.f32 0.0, %v666
    %v668 = vpop.f32.mrf.mxu0
    %669 = vmatprep.mubr.f32.mxu0 0.0
    %670 = vmatmul.mubr.f32.gmra.mxu0 %v73
    %v671 = vpop.f32.mrf.mxu0
    %v672 = vadd.f32 0.0, %v671
    %v673 = vpop.f32.mrf.mxu0
    %674 = vdwg.mxu0
    %675 = vmatprep.subr.mxu0 0.0
    %676 = vmatpush1.msra.mxu0 0.0
    %677 = vmatprep.subr.mxu0 0.0
    %678 = vmatpush1.msra.mxu0 0.0
    %679 = vmatprep.subr.mxu0 0.0
    %680 = vmatpush1.msra.mxu0 0.0
    %681 = vmatprep.subr.mxu0 0.0
    %682 = vmatpush1.msra.mxu0 0.0
    %683 = vmatprep.subr.mxu0 0.0
    %684 = vmatpush1.msra.mxu0 0.0
    %685 = vmatprep.subr.mxu0 0.0
    %686 = vmatpush1.msra.mxu0 0.0
    %687 = vmatprep.subr.mxu0 0.0
    %688 = vmatpush1.msra.mxu0 0.0
    %689 = vmatprep.subr.mxu0 0.0
    %690 = vmatpush1.msra.mxu0 0.0
    %691 = vmatprep.subr.mxu0 0.0
    %692 = vmatpush1.msra.mxu0 0.0
    %693 = vmatprep.subr.mxu0 0.0
    %694 = vmatpush1.msra.mxu0 0.0
    %695 = vmatprep.subr.mxu0 0.0
    %696 = vmatpush1.msra.mxu0 0.0
    %697 = vmatprep.subr.mxu0 0.0
    %698 = vmatpush1.msra.mxu0 0.0
    %699 = vmatprep.subr.mxu0 0.0
    %700 = vmatpush1.msra.mxu0 %v55
    %701 = vmatprep.subr.mxu0 0.0
    %702 = vmatpush1.msra.mxu0 %v54
    %703 = vmatprep.subr.mxu0 0.0
    %704 = vmatpush1.msra.mxu0 %v53
    %705 = vmatprep.subr.mxu0 0.0
    %706 = vmatpush1.msra.mxu0 %v52
    %707 = vmatprep.subr.mxu0 0.0
    %708 = vmatpush2.msra.mxu0 0.0
    %709 = vmatprep.subr.mxu0 0.0
    %710 = vmatpush2.msra.mxu0 0.0
    %711 = vmatprep.subr.mxu0 0.0
    %712 = vmatpush2.msra.mxu0 0.0
    %713 = vmatprep.subr.mxu0 0.0
    %714 = vmatpush2.msra.mxu0 0.0
    %715 = vmatprep.subr.mxu0 0.0
    %716 = vmatpush2.msra.mxu0 0.0
    %717 = vmatprep.subr.mxu0 0.0
    %718 = vmatpush2.msra.mxu0 0.0
    %719 = vmatprep.subr.mxu0 0.0
    %720 = vmatpush2.msra.mxu0 0.0
    %721 = vmatprep.subr.mxu0 0.0
    %722 = vmatpush2.msra.mxu0 0.0
    %723 = vmatprep.subr.mxu0 0.0
    %724 = vmatpush2.msra.mxu0 0.0
    %725 = vmatprep.subr.mxu0 0.0
    %726 = vmatpush2.msra.mxu0 0.0
    %727 = vmatprep.subr.mxu0 0.0
    %728 = vmatpush2.msra.mxu0 0.0
    %729 = vmatprep.subr.mxu0 0.0
    %730 = vmatpush2.msra.mxu0 0.0
    %731 = vmatprep.subr.mxu0 0.0
    %732 = vmatpush2.msra.mxu0 0.0
    %733 = vmatprep.subr.mxu0 0.0
    %734 = vmatpush2.msra.mxu0 0.0
    %735 = vmatprep.subr.mxu0 0.0
    %736 = vmatpush2.msra.mxu0 0.0
    %737 = vmatprep.subr.mxu0 0.0
    %738 = vmatpush2.msra.mxu0 0.0
    %739 = vmatprep.mubr.f32.mxu0 0.0
    %740 = vmatmul.mubr.f32.gmra.mxu0 %v70
    %v741 = vpop.f32.mrf.mxu0
    %v742 = vadd.f32 0.0, %v741
    %v743 = vpop.f32.mrf.mxu0
    %744 = vmatprep.mubr.f32.mxu0 0.0
    %745 = vmatmul.mubr.f32.gmra.mxu0 %v73
    %v746 = vpop.f32.mrf.mxu0
    %v747 = vadd.f32 0.0, %v746
    %v748 = vpop.f32.mrf.mxu0
    %749 = vdwg.mxu0
    %750 = vmatprep.subr.mxu0 0.0
    %751 = vmatpush1.msra.mxu0 0.0
    %752 = vmatprep.subr.mxu0 0.0
    %753 = vmatpush1.msra.mxu0 0.0
    %754 = vmatprep.subr.mxu0 0.0
    %755 = vmatpush1.msra.mxu0 0.0
    %756 = vmatprep.subr.mxu0 0.0
    %757 = vmatpush1.msra.mxu0 0.0
    %758 = vmatprep.subr.mxu0 0.0
    %759 = vmatpush1.msra.mxu0 0.0
    %760 = vmatprep.subr.mxu0 0.0
    %761 = vmatpush1.msra.mxu0 0.0
    %762 = vmatprep.subr.mxu0 0.0
    %763 = vmatpush1.msra.mxu0 0.0
    %764 = vmatprep.subr.mxu0 0.0
    %765 = vmatpush1.msra.mxu0 0.0
    %766 = vmatprep.subr.mxu0 0.0
    %767 = vmatpush1.msra.mxu0 0.0
    %768 = vmatprep.subr.mxu0 0.0
    %769 = vmatpush1.msra.mxu0 0.0
    %770 = vmatprep.subr.mxu0 0.0
    %771 = vmatpush1.msra.mxu0 0.0
    %772 = vmatprep.subr.mxu0 0.0
    %773 = vmatpush1.msra.mxu0 0.0
    %774 = vmatprep.subr.mxu0 0.0
    %775 = vmatpush1.msra.mxu0 %v59
    %776 = vmatprep.subr.mxu0 0.0
    %777 = vmatpush1.msra.mxu0 %v58
    %778 = vmatprep.subr.mxu0 0.0
    %779 = vmatpush1.msra.mxu0 %v57
    %780 = vmatprep.subr.mxu0 0.0
    %781 = vmatpush1.msra.mxu0 %v56
    %782 = vmatprep.subr.mxu0 0.0
    %783 = vmatpush2.msra.mxu0 0.0
    %784 = vmatprep.subr.mxu0 0.0
    %785 = vmatpush2.msra.mxu0 0.0
    %786 = vmatprep.subr.mxu0 0.0
    %787 = vmatpush2.msra.mxu0 0.0
    %788 = vmatprep.subr.mxu0 0.0
    %789 = vmatpush2.msra.mxu0 0.0
    %790 = vmatprep.subr.mxu0 0.0
    %791 = vmatpush2.msra.mxu0 0.0
    %792 = vmatprep.subr.mxu0 0.0
    %793 = vmatpush2.msra.mxu0 0.0
    %794 = vmatprep.subr.mxu0 0.0
    %795 = vmatpush2.msra.mxu0 0.0
    %796 = vmatprep.subr.mxu0 0.0
    %797 = vmatpush2.msra.mxu0 0.0
    %798 = vmatprep.subr.mxu0 0.0
    %799 = vmatpush2.msra.mxu0 0.0
    %800 = vmatprep.subr.mxu0 0.0
    %801 = vmatpush2.msra.mxu0 0.0
    %802 = vmatprep.subr.mxu0 0.0
    %803 = vmatpush2.msra.mxu0 0.0
    %804 = vmatprep.subr.mxu0 0.0
    %805 = vmatpush2.msra.mxu0 0.0
    %806 = vmatprep.subr.mxu0 0.0
    %807 = vmatpush2.msra.mxu0 0.0
    %808 = vmatprep.subr.mxu0 0.0
    %809 = vmatpush2.msra.mxu0 0.0
    %810 = vmatprep.subr.mxu0 0.0
    %811 = vmatpush2.msra.mxu0 0.0
    %812 = vmatprep.subr.mxu0 0.0
    %813 = vmatpush2.msra.mxu0 0.0
    %814 = vmatprep.mubr.f32.mxu0 0.0
    %815 = vmatmul.mubr.f32.gmra.mxu0 %v70
    %v816 = vpop.f32.mrf.mxu0
    %v817 = vadd.f32 0.0, %v816
    %v818 = vpop.f32.mrf.mxu0
    %819 = vmatprep.mubr.f32.mxu0 0.0
    %820 = vmatmul.mubr.f32.gmra.mxu0 %v73
    %v821 = vpop.f32.mrf.mxu0
    %v822 = vadd.f32 0.0, %v821
    %v823 = vpop.f32.mrf.mxu0
    %824 = vdwg.mxu0
    %825 = vmatprep.subr.mxu0 0.0
    %826 = vmatpush1.msra.mxu0 0.0
    %827 = vmatprep.subr.mxu0 0.0
    %828 = vmatpush1.msra.mxu0 0.0
    %829 = vmatprep.subr.mxu0 0.0
    %830 = vmatpush1.msra.mxu0 0.0
    %831 = vmatprep.subr.mxu0 0.0
    %832 = vmatpush1.msra.mxu0 0.0
    %833 = vmatprep.subr.mxu0 0.0
    %834 = vmatpush1.msra.mxu0 0.0
    %835 = vmatprep.subr.mxu0 0.0
    %836 = vmatpush1.msra.mxu0 0.0
    %837 = vmatprep.subr.mxu0 0.0
    %838 = vmatpush1.msra.mxu0 0.0
    %839 = vmatprep.subr.mxu0 0.0
    %840 = vmatpush1.msra.mxu0 0.0
    %841 = vmatprep.subr.mxu0 0.0
    %842 = vmatpush1.msra.mxu0 0.0
    %843 = vmatprep.subr.mxu0 0.0
    %844 = vmatpush1.msra.mxu0 0.0
    %845 = vmatprep.subr.mxu0 0.0
    %846 = vmatpush1.msra.mxu0 0.0
    %847 = vmatprep.subr.mxu0 0.0
    %848 = vmatpush1.msra.mxu0 0.0
    %849 = vmatprep.subr.mxu0 0.0
    %850 = vmatpush1.msra.mxu0 %v63
    %851 = vmatprep.subr.mxu0 0.0
    %852 = vmatpush1.msra.mxu0 %v62
    %853 = vmatprep.subr.mxu0 0.0
    %854 = vmatpush1.msra.mxu0 %v61
    %855 = vmatprep.subr.mxu0 0.0
    %856 = vmatpush1.msra.mxu0 %v60
    %857 = vmatprep.subr.mxu0 0.0
    %858 = vmatpush2.msra.mxu0 0.0
    %859 = vmatprep.subr.mxu0 0.0
    %860 = vmatpush2.msra.mxu0 0.0
    %861 = vmatprep.subr.mxu0 0.0
    %862 = vmatpush2.msra.mxu0 0.0
    %863 = vmatprep.subr.mxu0 0.0
    %864 = vmatpush2.msra.mxu0 0.0
    %865 = vmatprep.subr.mxu0 0.0
    %866 = vmatpush2.msra.mxu0 0.0
    %867 = vmatprep.subr.mxu0 0.0
    %868 = vmatpush2.msra.mxu0 0.0
    %869 = vmatprep.subr.mxu0 0.0
    %870 = vmatpush2.msra.mxu0 0.0
    %871 = vmatprep.subr.mxu0 0.0
    %872 = vmatpush2.msra.mxu0 0.0
    %873 = vmatprep.subr.mxu0 0.0
    %874 = vmatpush2.msra.mxu0 0.0
    %875 = vmatprep.subr.mxu0 0.0
    %876 = vmatpush2.msra.mxu0 0.0
    %877 = vmatprep.subr.mxu0 0.0
    %878 = vmatpush2.msra.mxu0 0.0
    %879 = vmatprep.subr.mxu0 0.0
    %880 = vmatpush2.msra.mxu0 0.0
    %881 = vmatprep.subr.mxu0 0.0
    %882 = vmatpush2.msra.mxu0 0.0
    %883 = vmatprep.subr.mxu0 0.0
    %884 = vmatpush2.msra.mxu0 0.0
    %885 = vmatprep.subr.mxu0 0.0
    %886 = vmatpush2.msra.mxu0 0.0
    %887 = vmatprep.subr.mxu0 0.0
    %888 = vmatpush2.msra.mxu0 0.0
    %889 = vmatprep.mubr.f32.mxu0 0.0
    %890 = vmatmul.mubr.f32.gmra.mxu0 %v70
    %v891 = vpop.f32.mrf.mxu0
    %v892 = vadd.f32 0.0, %v891
    %v893 = vpop.f32.mrf.mxu0
    %894 = vmatprep.mubr.f32.mxu0 0.0
    %895 = vmatmul.mubr.f32.gmra.mxu0 %v73
    %v896 = vpop.f32.mrf.mxu0
    %v897 = vadd.f32 0.0, %v896
    %v898 = vpop.f32.mrf.mxu0
    %899 = vdwg.mxu0
    %900 = vmatprep.subr.mxu0 0.0
    %901 = vmatpush1.msra.mxu0 0.0
    %902 = vmatprep.subr.mxu0 0.0
    %903 = vmatpush1.msra.mxu0 0.0
    %904 = vmatprep.subr.mxu0 0.0
    %905 = vmatpush1.msra.mxu0 0.0
    %906 = vmatprep.subr.mxu0 0.0
    %907 = vmatpush1.msra.mxu0 0.0
    %908 = vmatprep.subr.mxu0 0.0
    %909 = vmatpush1.msra.mxu0 0.0
    %910 = vmatprep.subr.mxu0 0.0
    %911 = vmatpush1.msra.mxu0 0.0
    %912 = vmatprep.subr.mxu0 0.0
    %913 = vmatpush1.msra.mxu0 0.0
    %914 = vmatprep.subr.mxu0 0.0
    %915 = vmatpush1.msra.mxu0 0.0
    %916 = vmatprep.subr.mxu0 0.0
    %917 = vmatpush1.msra.mxu0 0.0
    %918 = vmatprep.subr.mxu0 0.0
    %919 = vmatpush1.msra.mxu0 0.0
    %920 = vmatprep.subr.mxu0 0.0
    %921 = vmatpush1.msra.mxu0 0.0
    %922 = vmatprep.subr.mxu0 0.0
    %923 = vmatpush1.msra.mxu0 0.0
    %924 = vmatprep.subr.mxu0 0.0
    %925 = vmatpush1.msra.mxu0 %v67
    %926 = vmatprep.subr.mxu0 0.0
    %927 = vmatpush1.msra.mxu0 %v66
    %928 = vmatprep.subr.mxu0 0.0
    %929 = vmatpush1.msra.mxu0 %v65
    %930 = vmatprep.subr.mxu0 0.0
    %931 = vmatpush1.msra.mxu0 %v64
    %932 = vmatprep.subr.mxu0 0.0
    %933 = vmatpush2.msra.mxu0 0.0
    %934 = vmatprep.subr.mxu0 0.0
    %935 = vmatpush2.msra.mxu0 0.0
    %936 = vmatprep.subr.mxu0 0.0
    %937 = vmatpush2.msra.mxu0 0.0
    %938 = vmatprep.subr.mxu0 0.0
    %939 = vmatpush2.msra.mxu0 0.0
    %940 = vmatprep.subr.mxu0 0.0
    %941 = vmatpush2.msra.mxu0 0.0
    %942 = vmatprep.subr.mxu0 0.0
    %943 = vmatpush2.msra.mxu0 0.0
    %944 = vmatprep.subr.mxu0 0.0
    %945 = vmatpush2.msra.mxu0 0.0
    %946 = vmatprep.subr.mxu0 0.0
    %947 = vmatpush2.msra.mxu0 0.0
    %948 = vmatprep.subr.mxu0 0.0
    %949 = vmatpush2.msra.mxu0 0.0
    %950 = vmatprep.subr.mxu0 0.0
    %951 = vmatpush2.msra.mxu0 0.0
    %952 = vmatprep.subr.mxu0 0.0
    %953 = vmatpush2.msra.mxu0 0.0
    %954 = vmatprep.subr.mxu0 0.0
    %955 = vmatpush2.msra.mxu0 0.0
    %956 = vmatprep.subr.mxu0 0.0
    %957 = vmatpush2.msra.mxu0 0.0
    %958 = vmatprep.subr.mxu0 0.0
    %959 = vmatpush2.msra.mxu0 0.0
    %960 = vmatprep.subr.mxu0 0.0
    %961 = vmatpush2.msra.mxu0 0.0
    %962 = vmatprep.subr.mxu0 0.0
    %963 = vmatpush2.msra.mxu0 0.0
    %964 = vmatprep.mubr.f32.mxu0 0.0
    %965 = vmatmul.mubr.f32.gmra.mxu0 %v70
    %v966 = vpop.f32.mrf.mxu0
    %v967 = vadd.f32 0.0, %v966
    %v968 = vpop.f32.mrf.mxu0
    %969 = vmatprep.mubr.f32.mxu0 0.0
    %970 = vmatmul.mubr.f32.gmra.mxu0 %v73
    %v971 = vpop.f32.mrf.mxu0
    %v972 = vadd.f32 0.0, %v971
    %v973 = vpop.f32.mrf.mxu0
    %974 = vdwg.mxu0
    %vm975 = vcmask 64512
    %v977 = vsel %vm975, %v142, 0
    %v980 = vsel %vm975, %v442, 0
    %982 = vmatprep.subr.mxu0 0.0
    %983 = vmatpush1.xpose.msra.mxu0 0.0
    %984 = vmatprep.subr.mxu0 0.0
    %985 = vmatpush1.xpose.msra.mxu0 0.0
    %986 = vmatprep.subr.mxu0 0.0
    %987 = vmatpush1.xpose.msra.mxu0 0.0
    %988 = vmatprep.subr.mxu0 0.0
    %989 = vmatpush1.xpose.msra.mxu0 0.0
    %990 = vmatprep.subr.mxu0 0.0
    %991 = vmatpush1.xpose.msra.mxu0 0.0
    %992 = vmatprep.subr.mxu0 0.0
    %993 = vmatpush1.xpose.msra.mxu0 0.0
    %994 = vmatprep.subr.mxu0 0.0
    %995 = vmatpush1.xpose.msra.mxu0 0.0
    %996 = vmatprep.subr.mxu0 0.0
    %997 = vmatpush1.xpose.msra.mxu0 0.0
    %998 = vmatprep.subr.mxu0 0.0
    %999 = vmatpush1.xpose.msra.mxu0 0.0
    %1000 = vmatprep.subr.mxu0 0.0
    %1001 = vmatpush1.xpose.msra.mxu0 0.0
    %1002 = vmatprep.subr.mxu0 0.0
    %1003 = vmatpush1.xpose.msra.mxu0 0.0
    %1004 = vmatprep.subr.mxu0 0.0
    %1005 = vmatpush1.xpose.msra.mxu0 0.0
    %1006 = vmatprep.subr.mxu0 0.0
    %1007 = vmatpush1.xpose.msra.mxu0 0.0
    %1008 = vmatprep.subr.mxu0 0.0
    %1009 = vmatpush1.xpose.msra.mxu0 0.0
    %1010 = vmatprep.subr.mxu0 0.0
    %1011 = vmatpush1.xpose.msra.mxu0 0.0
    %1012 = vmatprep.subr.mxu0 0.0
    %1013 = vmatpush1.xpose.msra.mxu0 %v980
    %1014 = vmatprep.subr.mxu0 0.0
    %1015 = vmatpush2.xpose.msra.mxu0 0.0
    %1016 = vmatprep.subr.mxu0 0.0
    %1017 = vmatpush2.xpose.msra.mxu0 0.0
    %1018 = vmatprep.subr.mxu0 0.0
    %1019 = vmatpush2.xpose.msra.mxu0 0.0
    %1020 = vmatprep.subr.mxu0 0.0
    %1021 = vmatpush2.xpose.msra.mxu0 0.0
    %1022 = vmatprep.subr.mxu0 0.0
    %1023 = vmatpush2.xpose.msra.mxu0 0.0
    %1024 = vmatprep.subr.mxu0 0.0
    %1025 = vmatpush2.xpose.msra.mxu0 0.0
    %1026 = vmatprep.subr.mxu0 0.0
    %1027 = vmatpush2.xpose.msra.mxu0 0.0
    %1028 = vmatprep.subr.mxu0 0.0
    %1029 = vmatpush2.xpose.msra.mxu0 0.0
    %1030 = vmatprep.subr.mxu0 0.0
    %1031 = vmatpush2.xpose.msra.mxu0 0.0
    %1032 = vmatprep.subr.mxu0 0.0
    %1033 = vmatpush2.xpose.msra.mxu0 0.0
    %1034 = vmatprep.subr.mxu0 0.0
    %1035 = vmatpush2.xpose.msra.mxu0 0.0
    %1036 = vmatprep.subr.mxu0 0.0
    %1037 = vmatpush2.xpose.msra.mxu0 0.0
    %1038 = vmatprep.subr.mxu0 0.0
    %1039 = vmatpush2.xpose.msra.mxu0 0.0
    %1040 = vmatprep.subr.mxu0 0.0
    %1041 = vmatpush2.xpose.msra.mxu0 0.0
    %1042 = vmatprep.subr.mxu0 0.0
    %1043 = vmatpush2.xpose.msra.mxu0 0.0
    %1044 = vmatprep.subr.mxu0 0.0
    %1045 = vmatpush2.xpose.msra.mxu0 0.0
    %1046 = vmatprep.mubr.f32.mxu0 0.0
    %1047 = vmatmul.mubr.f32.gmra.mxu0 %v977
    %v1048 = vpop.f32.mrf.mxu0
    %v1049 = vadd.f32 0.0, %v1048
    %v1050 = vpop.f32.mrf.mxu0
    %1051 = vdwg.mxu0
    %v1053 = vsel %vm975, %v147, 0
    %v1056 = vsel %vm975, %v447, 0
    %1058 = vmatprep.subr.mxu0 0.0
    %1059 = vmatpush1.xpose.msra.mxu0 0.0
    %1060 = vmatprep.subr.mxu0 0.0
    %1061 = vmatpush1.xpose.msra.mxu0 0.0
    %1062 = vmatprep.subr.mxu0 0.0
    %1063 = vmatpush1.xpose.msra.mxu0 0.0
    %1064 = vmatprep.subr.mxu0 0.0
    %1065 = vmatpush1.xpose.msra.mxu0 0.0
    %1066 = vmatprep.subr.mxu0 0.0
    %1067 = vmatpush1.xpose.msra.mxu0 0.0
    %1068 = vmatprep.subr.mxu0 0.0
    %1069 = vmatpush1.xpose.msra.mxu0 0.0
    %1070 = vmatprep.subr.mxu0 0.0
    %1071 = vmatpush1.xpose.msra.mxu0 0.0
    %1072 = vmatprep.subr.mxu0 0.0
    %1073 = vmatpush1.xpose.msra.mxu0 0.0
    %1074 = vmatprep.subr.mxu0 0.0
    %1075 = vmatpush1.xpose.msra.mxu0 0.0
    %1076 = vmatprep.subr.mxu0 0.0
    %1077 = vmatpush1.xpose.msra.mxu0 0.0
    %1078 = vmatprep.subr.mxu0 0.0
    %1079 = vmatpush1.xpose.msra.mxu0 0.0
    %1080 = vmatprep.subr.mxu0 0.0
    %1081 = vmatpush1.xpose.msra.mxu0 0.0
    %1082 = vmatprep.subr.mxu0 0.0
    %1083 = vmatpush1.xpose.msra.mxu0 0.0
    %1084 = vmatprep.subr.mxu0 0.0
    %1085 = vmatpush1.xpose.msra.mxu0 0.0
    %1086 = vmatprep.subr.mxu0 0.0
    %1087 = vmatpush1.xpose.msra.mxu0 0.0
    %1088 = vmatprep.subr.mxu0 0.0
    %1089 = vmatpush1.xpose.msra.mxu0 %v1056
    %1090 = vmatprep.subr.mxu0 0.0
    %1091 = vmatpush2.xpose.msra.mxu0 0.0
    %1092 = vmatprep.subr.mxu0 0.0
    %1093 = vmatpush2.xpose.msra.mxu0 0.0
    %1094 = vmatprep.subr.mxu0 0.0
    %1095 = vmatpush2.xpose.msra.mxu0 0.0
    %1096 = vmatprep.subr.mxu0 0.0
    %1097 = vmatpush2.xpose.msra.mxu0 0.0
    %1098 = vmatprep.subr.mxu0 0.0
    %1099 = vmatpush2.xpose.msra.mxu0 0.0
    %1100 = vmatprep.subr.mxu0 0.0
    %1101 = vmatpush2.xpose.msra.mxu0 0.0
    %1102 = vmatprep.subr.mxu0 0.0
    %1103 = vmatpush2.xpose.msra.mxu0 0.0
    %1104 = vmatprep.subr.mxu0 0.0
    %1105 = vmatpush2.xpose.msra.mxu0 0.0
    %1106 = vmatprep.subr.mxu0 0.0
    %1107 = vmatpush2.xpose.msra.mxu0 0.0
    %1108 = vmatprep.subr.mxu0 0.0
    %1109 = vmatpush2.xpose.msra.mxu0 0.0
    %1110 = vmatprep.subr.mxu0 0.0
    %1111 = vmatpush2.xpose.msra.mxu0 0.0
    %1112 = vmatprep.subr.mxu0 0.0
    %1113 = vmatpush2.xpose.msra.mxu0 0.0
    %1114 = vmatprep.subr.mxu0 0.0
    %1115 = vmatpush2.xpose.msra.mxu0 0.0
    %1116 = vmatprep.subr.mxu0 0.0
    %1117 = vmatpush2.xpose.msra.mxu0 0.0
    %1118 = vmatprep.subr.mxu0 0.0
    %1119 = vmatpush2.xpose.msra.mxu0 0.0
    %1120 = vmatprep.subr.mxu0 0.0
    %1121 = vmatpush2.xpose.msra.mxu0 0.0
    %1122 = vmatprep.mubr.f32.mxu0 0.0
    %1123 = vmatmul.mubr.f32.gmra.mxu0 %v1053
    %v1124 = vpop.f32.mrf.mxu0
    %v1125 = vadd.f32 0.0, %v1124
    %v1126 = vpop.f32.mrf.mxu0
    %1127 = vdwg.mxu0
    %v1129 = vsel %vm975, %v217, 0
    %v1132 = vsel %vm975, %v517, 0
    %1134 = vmatprep.subr.mxu0 0.0
    %1135 = vmatpush1.xpose.msra.mxu0 0.0
    %1136 = vmatprep.subr.mxu0 0.0
    %1137 = vmatpush1.xpose.msra.mxu0 0.0
    %1138 = vmatprep.subr.mxu0 0.0
    %1139 = vmatpush1.xpose.msra.mxu0 0.0
    %1140 = vmatprep.subr.mxu0 0.0
    %1141 = vmatpush1.xpose.msra.mxu0 0.0
    %1142 = vmatprep.subr.mxu0 0.0
    %1143 = vmatpush1.xpose.msra.mxu0 0.0
    %1144 = vmatprep.subr.mxu0 0.0
    %1145 = vmatpush1.xpose.msra.mxu0 0.0
    %1146 = vmatprep.subr.mxu0 0.0
    %1147 = vmatpush1.xpose.msra.mxu0 0.0
    %1148 = vmatprep.subr.mxu0 0.0
    %1149 = vmatpush1.xpose.msra.mxu0 0.0
    %1150 = vmatprep.subr.mxu0 0.0
    %1151 = vmatpush1.xpose.msra.mxu0 0.0
    %1152 = vmatprep.subr.mxu0 0.0
    %1153 = vmatpush1.xpose.msra.mxu0 0.0
    %1154 = vmatprep.subr.mxu0 0.0
    %1155 = vmatpush1.xpose.msra.mxu0 0.0
    %1156 = vmatprep.subr.mxu0 0.0
    %1157 = vmatpush1.xpose.msra.mxu0 0.0
    %1158 = vmatprep.subr.mxu0 0.0
    %1159 = vmatpush1.xpose.msra.mxu0 0.0
    %1160 = vmatprep.subr.mxu0 0.0
    %1161 = vmatpush1.xpose.msra.mxu0 0.0
    %1162 = vmatprep.subr.mxu0 0.0
    %1163 = vmatpush1.xpose.msra.mxu0 0.0
    %1164 = vmatprep.subr.mxu0 0.0
    %1165 = vmatpush1.xpose.msra.mxu0 %v1132
    %1166 = vmatprep.subr.mxu0 0.0
    %1167 = vmatpush2.xpose.msra.mxu0 0.0
    %1168 = vmatprep.subr.mxu0 0.0
    %1169 = vmatpush2.xpose.msra.mxu0 0.0
    %1170 = vmatprep.subr.mxu0 0.0
    %1171 = vmatpush2.xpose.msra.mxu0 0.0
    %1172 = vmatprep.subr.mxu0 0.0
    %1173 = vmatpush2.xpose.msra.mxu0 0.0
    %1174 = vmatprep.subr.mxu0 0.0
    %1175 = vmatpush2.xpose.msra.mxu0 0.0
    %1176 = vmatprep.subr.mxu0 0.0
    %1177 = vmatpush2.xpose.msra.mxu0 0.0
    %1178 = vmatprep.subr.mxu0 0.0
    %1179 = vmatpush2.xpose.msra.mxu0 0.0
    %1180 = vmatprep.subr.mxu0 0.0
    %1181 = vmatpush2.xpose.msra.mxu0 0.0
    %1182 = vmatprep.subr.mxu0 0.0
    %1183 = vmatpush2.xpose.msra.mxu0 0.0
    %1184 = vmatprep.subr.mxu0 0.0
    %1185 = vmatpush2.xpose.msra.mxu0 0.0
    %1186 = vmatprep.subr.mxu0 0.0
    %1187 = vmatpush2.xpose.msra.mxu0 0.0
    %1188 = vmatprep.subr.mxu0 0.0
    %1189 = vmatpush2.xpose.msra.mxu0 0.0
    %1190 = vmatprep.subr.mxu0 0.0
    %1191 = vmatpush2.xpose.msra.mxu0 0.0
    %1192 = vmatprep.subr.mxu0 0.0
    %1193 = vmatpush2.xpose.msra.mxu0 0.0
    %1194 = vmatprep.subr.mxu0 0.0
    %1195 = vmatpush2.xpose.msra.mxu0 0.0
    %1196 = vmatprep.subr.mxu0 0.0
    %1197 = vmatpush2.xpose.msra.mxu0 0.0
    %1198 = vmatprep.mubr.f32.mxu0 0.0
    %1199 = vmatmul.mubr.f32.gmra.mxu0 %v1129
    %v1200 = vpop.f32.mrf.mxu0
    %v1201 = vadd.f32 0.0, %v1200
    %v1202 = vpop.f32.mrf.mxu0
    %1203 = vdwg.mxu0
    %v1205 = vsel %vm975, %v222, 0
    %v1208 = vsel %vm975, %v522, 0
    %1210 = vmatprep.subr.mxu0 0.0
    %1211 = vmatpush1.xpose.msra.mxu0 0.0
    %1212 = vmatprep.subr.mxu0 0.0
    %1213 = vmatpush1.xpose.msra.mxu0 0.0
    %1214 = vmatprep.subr.mxu0 0.0
    %1215 = vmatpush1.xpose.msra.mxu0 0.0
    %1216 = vmatprep.subr.mxu0 0.0
    %1217 = vmatpush1.xpose.msra.mxu0 0.0
    %1218 = vmatprep.subr.mxu0 0.0
    %1219 = vmatpush1.xpose.msra.mxu0 0.0
    %1220 = vmatprep.subr.mxu0 0.0
    %1221 = vmatpush1.xpose.msra.mxu0 0.0
    %1222 = vmatprep.subr.mxu0 0.0
    %1223 = vmatpush1.xpose.msra.mxu0 0.0
    %1224 = vmatprep.subr.mxu0 0.0
    %1225 = vmatpush1.xpose.msra.mxu0 0.0
    %1226 = vmatprep.subr.mxu0 0.0
    %1227 = vmatpush1.xpose.msra.mxu0 0.0
    %1228 = vmatprep.subr.mxu0 0.0
    %1229 = vmatpush1.xpose.msra.mxu0 0.0
    %1230 = vmatprep.subr.mxu0 0.0
    %1231 = vmatpush1.xpose.msra.mxu0 0.0
    %1232 = vmatprep.subr.mxu0 0.0
    %1233 = vmatpush1.xpose.msra.mxu0 0.0
    %1234 = vmatprep.subr.mxu0 0.0
    %1235 = vmatpush1.xpose.msra.mxu0 0.0
    %1236 = vmatprep.subr.mxu0 0.0
    %1237 = vmatpush1.xpose.msra.mxu0 0.0
    %1238 = vmatprep.subr.mxu0 0.0
    %1239 = vmatpush1.xpose.msra.mxu0 0.0
    %1240 = vmatprep.subr.mxu0 0.0
    %1241 = vmatpush1.xpose.msra.mxu0 %v1208
    %1242 = vmatprep.subr.mxu0 0.0
    %1243 = vmatpush2.xpose.msra.mxu0 0.0
    %1244 = vmatprep.subr.mxu0 0.0
    %1245 = vmatpush2.xpose.msra.mxu0 0.0
    %1246 = vmatprep.subr.mxu0 0.0
    %1247 = vmatpush2.xpose.msra.mxu0 0.0
    %1248 = vmatprep.subr.mxu0 0.0
    %1249 = vmatpush2.xpose.msra.mxu0 0.0
    %1250 = vmatprep.subr.mxu0 0.0
    %1251 = vmatpush2.xpose.msra.mxu0 0.0
    %1252 = vmatprep.subr.mxu0 0.0
    %1253 = vmatpush2.xpose.msra.mxu0 0.0
    %1254 = vmatprep.subr.mxu0 0.0
    %1255 = vmatpush2.xpose.msra.mxu0 0.0
    %1256 = vmatprep.subr.mxu0 0.0
    %1257 = vmatpush2.xpose.msra.mxu0 0.0
    %1258 = vmatprep.subr.mxu0 0.0
    %1259 = vmatpush2.xpose.msra.mxu0 0.0
    %1260 = vmatprep.subr.mxu0 0.0
    %1261 = vmatpush2.xpose.msra.mxu0 0.0
    %1262 = vmatprep.subr.mxu0 0.0
    %1263 = vmatpush2.xpose.msra.mxu0 0.0
    %1264 = vmatprep.subr.mxu0 0.0
    %1265 = vmatpush2.xpose.msra.mxu0 0.0
    %1266 = vmatprep.subr.mxu0 0.0
    %1267 = vmatpush2.xpose.msra.mxu0 0.0
    %1268 = vmatprep.subr.mxu0 0.0
    %1269 = vmatpush2.xpose.msra.mxu0 0.0
    %1270 = vmatprep.subr.mxu0 0.0
    %1271 = vmatpush2.xpose.msra.mxu0 0.0
    %1272 = vmatprep.subr.mxu0 0.0
    %1273 = vmatpush2.xpose.msra.mxu0 0.0
    %1274 = vmatprep.mubr.f32.mxu0 0.0
    %1275 = vmatmul.mubr.f32.gmra.mxu0 %v1205
    %v1276 = vpop.f32.mrf.mxu0
    %v1277 = vadd.f32 0.0, %v1276
    %v1278 = vpop.f32.mrf.mxu0
    %1279 = vdwg.mxu0
    %v1281 = vsel %vm975, %v292, 0
    %v1284 = vsel %vm975, %v592, 0
    %1286 = vmatprep.subr.mxu0 0.0
    %1287 = vmatpush1.xpose.msra.mxu0 0.0
    %1288 = vmatprep.subr.mxu0 0.0
    %1289 = vmatpush1.xpose.msra.mxu0 0.0
    %1290 = vmatprep.subr.mxu0 0.0
    %1291 = vmatpush1.xpose.msra.mxu0 0.0
    %1292 = vmatprep.subr.mxu0 0.0
    %1293 = vmatpush1.xpose.msra.mxu0 0.0
    %1294 = vmatprep.subr.mxu0 0.0
    %1295 = vmatpush1.xpose.msra.mxu0 0.0
    %1296 = vmatprep.subr.mxu0 0.0
    %1297 = vmatpush1.xpose.msra.mxu0 0.0
    %1298 = vmatprep.subr.mxu0 0.0
    %1299 = vmatpush1.xpose.msra.mxu0 0.0
    %1300 = vmatprep.subr.mxu0 0.0
    %1301 = vmatpush1.xpose.msra.mxu0 0.0
    %1302 = vmatprep.subr.mxu0 0.0
    %1303 = vmatpush1.xpose.msra.mxu0 0.0
    %1304 = vmatprep.subr.mxu0 0.0
    %1305 = vmatpush1.xpose.msra.mxu0 0.0
    %1306 = vmatprep.subr.mxu0 0.0
    %1307 = vmatpush1.xpose.msra.mxu0 0.0
    %1308 = vmatprep.subr.mxu0 0.0
    %1309 = vmatpush1.xpose.msra.mxu0 0.0
    %1310 = vmatprep.subr.mxu0 0.0
    %1311 = vmatpush1.xpose.msra.mxu0 0.0
    %1312 = vmatprep.subr.mxu0 0.0
    %1313 = vmatpush1.xpose.msra.mxu0 0.0
    %1314 = vmatprep.subr.mxu0 0.0
    %1315 = vmatpush1.xpose.msra.mxu0 0.0
    %1316 = vmatprep.subr.mxu0 0.0
    %1317 = vmatpush1.xpose.msra.mxu0 %v1284
    %1318 = vmatprep.subr.mxu0 0.0
    %1319 = vmatpush2.xpose.msra.mxu0 0.0
    %1320 = vmatprep.subr.mxu0 0.0
    %1321 = vmatpush2.xpose.msra.mxu0 0.0
    %1322 = vmatprep.subr.mxu0 0.0
    %1323 = vmatpush2.xpose.msra.mxu0 0.0
    %1324 = vmatprep.subr.mxu0 0.0
    %1325 = vmatpush2.xpose.msra.mxu0 0.0
    %1326 = vmatprep.subr.mxu0 0.0
    %1327 = vmatpush2.xpose.msra.mxu0 0.0
    %1328 = vmatprep.subr.mxu0 0.0
    %1329 = vmatpush2.xpose.msra.mxu0 0.0
    %1330 = vmatprep.subr.mxu0 0.0
    %1331 = vmatpush2.xpose.msra.mxu0 0.0
    %1332 = vmatprep.subr.mxu0 0.0
    %1333 = vmatpush2.xpose.msra.mxu0 0.0
    %1334 = vmatprep.subr.mxu0 0.0
    %1335 = vmatpush2.xpose.msra.mxu0 0.0
    %1336 = vmatprep.subr.mxu0 0.0
    %1337 = vmatpush2.xpose.msra.mxu0 0.0
    %1338 = vmatprep.subr.mxu0 0.0
    %1339 = vmatpush2.xpose.msra.mxu0 0.0
    %1340 = vmatprep.subr.mxu0 0.0
    %1341 = vmatpush2.xpose.msra.mxu0 0.0
    %1342 = vmatprep.subr.mxu0 0.0
    %1343 = vmatpush2.xpose.msra.mxu0 0.0
    %1344 = vmatprep.subr.mxu0 0.0
    %1345 = vmatpush2.xpose.msra.mxu0 0.0
    %1346 = vmatprep.subr.mxu0 0.0
    %1347 = vmatpush2.xpose.msra.mxu0 0.0
    %1348 = vmatprep.subr.mxu0 0.0
    %1349 = vmatpush2.xpose.msra.mxu0 0.0
    %1350 = vmatprep.mubr.f32.mxu0 0.0
    %1351 = vmatmul.mubr.f32.gmra.mxu0 %v1281
    %v1352 = vpop.f32.mrf.mxu0
    %v1353 = vadd.f32 0.0, %v1352
    %v1354 = vpop.f32.mrf.mxu0
    %1355 = vdwg.mxu0
    %v1357 = vsel %vm975, %v297, 0
    %v1360 = vsel %vm975, %v597, 0
    %1362 = vmatprep.subr.mxu0 0.0
    %1363 = vmatpush1.xpose.msra.mxu0 0.0
    %1364 = vmatprep.subr.mxu0 0.0
    %1365 = vmatpush1.xpose.msra.mxu0 0.0
    %1366 = vmatprep.subr.mxu0 0.0
    %1367 = vmatpush1.xpose.msra.mxu0 0.0
    %1368 = vmatprep.subr.mxu0 0.0
    %1369 = vmatpush1.xpose.msra.mxu0 0.0
    %1370 = vmatprep.subr.mxu0 0.0
    %1371 = vmatpush1.xpose.msra.mxu0 0.0
    %1372 = vmatprep.subr.mxu0 0.0
    %1373 = vmatpush1.xpose.msra.mxu0 0.0
    %1374 = vmatprep.subr.mxu0 0.0
    %1375 = vmatpush1.xpose.msra.mxu0 0.0
    %1376 = vmatprep.subr.mxu0 0.0
    %1377 = vmatpush1.xpose.msra.mxu0 0.0
    %1378 = vmatprep.subr.mxu0 0.0
    %1379 = vmatpush1.xpose.msra.mxu0 0.0
    %1380 = vmatprep.subr.mxu0 0.0
    %1381 = vmatpush1.xpose.msra.mxu0 0.0
    %1382 = vmatprep.subr.mxu0 0.0
    %1383 = vmatpush1.xpose.msra.mxu0 0.0
    %1384 = vmatprep.subr.mxu0 0.0
    %1385 = vmatpush1.xpose.msra.mxu0 0.0
    %1386 = vmatprep.subr.mxu0 0.0
    %1387 = vmatpush1.xpose.msra.mxu0 0.0
    %1388 = vmatprep.subr.mxu0 0.0
    %1389 = vmatpush1.xpose.msra.mxu0 0.0
    %1390 = vmatprep.subr.mxu0 0.0
    %1391 = vmatpush1.xpose.msra.mxu0 0.0
    %1392 = vmatprep.subr.mxu0 0.0
    %1393 = vmatpush1.xpose.msra.mxu0 %v1360
    %1394 = vmatprep.subr.mxu0 0.0
    %1395 = vmatpush2.xpose.msra.mxu0 0.0
    %1396 = vmatprep.subr.mxu0 0.0
    %1397 = vmatpush2.xpose.msra.mxu0 0.0
    %1398 = vmatprep.subr.mxu0 0.0
    %1399 = vmatpush2.xpose.msra.mxu0 0.0
    %1400 = vmatprep.subr.mxu0 0.0
    %1401 = vmatpush2.xpose.msra.mxu0 0.0
    %1402 = vmatprep.subr.mxu0 0.0
    %1403 = vmatpush2.xpose.msra.mxu0 0.0
    %1404 = vmatprep.subr.mxu0 0.0
    %1405 = vmatpush2.xpose.msra.mxu0 0.0
    %1406 = vmatprep.subr.mxu0 0.0
    %1407 = vmatpush2.xpose.msra.mxu0 0.0
    %1408 = vmatprep.subr.mxu0 0.0
    %1409 = vmatpush2.xpose.msra.mxu0 0.0
    %1410 = vmatprep.subr.mxu0 0.0
    %1411 = vmatpush2.xpose.msra.mxu0 0.0
    %1412 = vmatprep.subr.mxu0 0.0
    %1413 = vmatpush2.xpose.msra.mxu0 0.0
    %1414 = vmatprep.subr.mxu0 0.0
    %1415 = vmatpush2.xpose.msra.mxu0 0.0
    %1416 = vmatprep.subr.mxu0 0.0
    %1417 = vmatpush2.xpose.msra.mxu0 0.0
    %1418 = vmatprep.subr.mxu0 0.0
    %1419 = vmatpush2.xpose.msra.mxu0 0.0
    %1420 = vmatprep.subr.mxu0 0.0
    %1421 = vmatpush2.xpose.msra.mxu0 0.0
    %1422 = vmatprep.subr.mxu0 0.0
    %1423 = vmatpush2.xpose.msra.mxu0 0.0
    %1424 = vmatprep.subr.mxu0 0.0
    %1425 = vmatpush2.xpose.msra.mxu0 0.0
    %1426 = vmatprep.mubr.f32.mxu0 0.0
    %1427 = vmatmul.mubr.f32.gmra.mxu0 %v1357
    %v1428 = vpop.f32.mrf.mxu0
    %v1429 = vadd.f32 0.0, %v1428
    %v1430 = vpop.f32.mrf.mxu0
    %1431 = vdwg.mxu0
    %v1433 = vsel %vm975, %v367, 0
    %v1436 = vsel %vm975, %v667, 0
    %1438 = vmatprep.subr.mxu0 0.0
    %1439 = vmatpush1.xpose.msra.mxu0 0.0
    %1440 = vmatprep.subr.mxu0 0.0
    %1441 = vmatpush1.xpose.msra.mxu0 0.0
    %1442 = vmatprep.subr.mxu0 0.0
    %1443 = vmatpush1.xpose.msra.mxu0 0.0
    %1444 = vmatprep.subr.mxu0 0.0
    %1445 = vmatpush1.xpose.msra.mxu0 0.0
    %1446 = vmatprep.subr.mxu0 0.0
    %1447 = vmatpush1.xpose.msra.mxu0 0.0
    %1448 = vmatprep.subr.mxu0 0.0
    %1449 = vmatpush1.xpose.msra.mxu0 0.0
    %1450 = vmatprep.subr.mxu0 0.0
    %1451 = vmatpush1.xpose.msra.mxu0 0.0
    %1452 = vmatprep.subr.mxu0 0.0
    %1453 = vmatpush1.xpose.msra.mxu0 0.0
    %1454 = vmatprep.subr.mxu0 0.0
    %1455 = vmatpush1.xpose.msra.mxu0 0.0
    %1456 = vmatprep.subr.mxu0 0.0
    %1457 = vmatpush1.xpose.msra.mxu0 0.0
    %1458 = vmatprep.subr.mxu0 0.0
    %1459 = vmatpush1.xpose.msra.mxu0 0.0
    %1460 = vmatprep.subr.mxu0 0.0
    %1461 = vmatpush1.xpose.msra.mxu0 0.0
    %1462 = vmatprep.subr.mxu0 0.0
    %1463 = vmatpush1.xpose.msra.mxu0 0.0
    %1464 = vmatprep.subr.mxu0 0.0
    %1465 = vmatpush1.xpose.msra.mxu0 0.0
    %1466 = vmatprep.subr.mxu0 0.0
    %1467 = vmatpush1.xpose.msra.mxu0 0.0
    %1468 = vmatprep.subr.mxu0 0.0
    %1469 = vmatpush1.xpose.msra.mxu0 %v1436
    %1470 = vmatprep.subr.mxu0 0.0
    %1471 = vmatpush2.xpose.msra.mxu0 0.0
    %1472 = vmatprep.subr.mxu0 0.0
    %1473 = vmatpush2.xpose.msra.mxu0 0.0
    %1474 = vmatprep.subr.mxu0 0.0
    %1475 = vmatpush2.xpose.msra.mxu0 0.0
    %1476 = vmatprep.subr.mxu0 0.0
    %1477 = vmatpush2.xpose.msra.mxu0 0.0
    %1478 = vmatprep.subr.mxu0 0.0
    %1479 = vmatpush2.xpose.msra.mxu0 0.0
    %1480 = vmatprep.subr.mxu0 0.0
    %1481 = vmatpush2.xpose.msra.mxu0 0.0
    %1482 = vmatprep.subr.mxu0 0.0
    %1483 = vmatpush2.xpose.msra.mxu0 0.0
    %1484 = vmatprep.subr.mxu0 0.0
    %1485 = vmatpush2.xpose.msra.mxu0 0.0
    %1486 = vmatprep.subr.mxu0 0.0
    %1487 = vmatpush2.xpose.msra.mxu0 0.0
    %1488 = vmatprep.subr.mxu0 0.0
    %1489 = vmatpush2.xpose.msra.mxu0 0.0
    %1490 = vmatprep.subr.mxu0 0.0
    %1491 = vmatpush2.xpose.msra.mxu0 0.0
    %1492 = vmatprep.subr.mxu0 0.0
    %1493 = vmatpush2.xpose.msra.mxu0 0.0
    %1494 = vmatprep.subr.mxu0 0.0
    %1495 = vmatpush2.xpose.msra.mxu0 0.0
    %1496 = vmatprep.subr.mxu0 0.0
    %1497 = vmatpush2.xpose.msra.mxu0 0.0
    %1498 = vmatprep.subr.mxu0 0.0
    %1499 = vmatpush2.xpose.msra.mxu0 0.0
    %1500 = vmatprep.subr.mxu0 0.0
    %1501 = vmatpush2.xpose.msra.mxu0 0.0
    %1502 = vmatprep.mubr.f32.mxu0 0.0
    %1503 = vmatmul.mubr.f32.gmra.mxu0 %v1433
    %v1504 = vpop.f32.mrf.mxu0
    %v1505 = vadd.f32 0.0, %v1504
    %v1506 = vpop.f32.mrf.mxu0
    %1507 = vdwg.mxu0
    %v1509 = vsel %vm975, %v372, 0
    %v1512 = vsel %vm975, %v672, 0
    %1514 = vmatprep.subr.mxu0 0.0
    %1515 = vmatpush1.xpose.msra.mxu0 0.0
    %1516 = vmatprep.subr.mxu0 0.0
    %1517 = vmatpush1.xpose.msra.mxu0 0.0
    %1518 = vmatprep.subr.mxu0 0.0
    %1519 = vmatpush1.xpose.msra.mxu0 0.0
    %1520 = vmatprep.subr.mxu0 0.0
    %1521 = vmatpush1.xpose.msra.mxu0 0.0
    %1522 = vmatprep.subr.mxu0 0.0
    %1523 = vmatpush1.xpose.msra.mxu0 0.0
    %1524 = vmatprep.subr.mxu0 0.0
    %1525 = vmatpush1.xpose.msra.mxu0 0.0
    %1526 = vmatprep.subr.mxu0 0.0
    %1527 = vmatpush1.xpose.msra.mxu0 0.0
    %1528 = vmatprep.subr.mxu0 0.0
    %1529 = vmatpush1.xpose.msra.mxu0 0.0
    %1530 = vmatprep.subr.mxu0 0.0
    %1531 = vmatpush1.xpose.msra.mxu0 0.0
    %1532 = vmatprep.subr.mxu0 0.0
    %1533 = vmatpush1.xpose.msra.mxu0 0.0
    %1534 = vmatprep.subr.mxu0 0.0
    %1535 = vmatpush1.xpose.msra.mxu0 0.0
    %1536 = vmatprep.subr.mxu0 0.0
    %1537 = vmatpush1.xpose.msra.mxu0 0.0
    %1538 = vmatprep.subr.mxu0 0.0
    %1539 = vmatpush1.xpose.msra.mxu0 0.0
    %1540 = vmatprep.subr.mxu0 0.0
    %1541 = vmatpush1.xpose.msra.mxu0 0.0
    %1542 = vmatprep.subr.mxu0 0.0
    %1543 = vmatpush1.xpose.msra.mxu0 0.0
    %1544 = vmatprep.subr.mxu0 0.0
    %1545 = vmatpush1.xpose.msra.mxu0 %v1512
    %1546 = vmatprep.subr.mxu0 0.0
    %1547 = vmatpush2.xpose.msra.mxu0 0.0
    %1548 = vmatprep.subr.mxu0 0.0
    %1549 = vmatpush2.xpose.msra.mxu0 0.0
    %1550 = vmatprep.subr.mxu0 0.0
    %1551 = vmatpush2.xpose.msra.mxu0 0.0
    %1552 = vmatprep.subr.mxu0 0.0
    %1553 = vmatpush2.xpose.msra.mxu0 0.0
    %1554 = vmatprep.subr.mxu0 0.0
    %1555 = vmatpush2.xpose.msra.mxu0 0.0
    %1556 = vmatprep.subr.mxu0 0.0
    %1557 = vmatpush2.xpose.msra.mxu0 0.0
    %1558 = vmatprep.subr.mxu0 0.0
    %1559 = vmatpush2.xpose.msra.mxu0 0.0
    %1560 = vmatprep.subr.mxu0 0.0
    %1561 = vmatpush2.xpose.msra.mxu0 0.0
    %1562 = vmatprep.subr.mxu0 0.0
    %1563 = vmatpush2.xpose.msra.mxu0 0.0
    %1564 = vmatprep.subr.mxu0 0.0
    %1565 = vmatpush2.xpose.msra.mxu0 0.0
    %1566 = vmatprep.subr.mxu0 0.0
    %1567 = vmatpush2.xpose.msra.mxu0 0.0
    %1568 = vmatprep.subr.mxu0 0.0
    %1569 = vmatpush2.xpose.msra.mxu0 0.0
    %1570 = vmatprep.subr.mxu0 0.0
    %1571 = vmatpush2.xpose.msra.mxu0 0.0
    %1572 = vmatprep.subr.mxu0 0.0
    %1573 = vmatpush2.xpose.msra.mxu0 0.0
    %1574 = vmatprep.subr.mxu0 0.0
    %1575 = vmatpush2.xpose.msra.mxu0 0.0
    %1576 = vmatprep.subr.mxu0 0.0
    %1577 = vmatpush2.xpose.msra.mxu0 0.0
    %1578 = vmatprep.mubr.f32.mxu0 0.0
    %1579 = vmatmul.mubr.f32.gmra.mxu0 %v1509
    %v1580 = vpop.f32.mrf.mxu0
    %v1581 = vadd.f32 0.0, %v1580
    %v1582 = vpop.f32.mrf.mxu0
    %1583 = vdwg.mxu0
    %v1584 = vmul.f32 %v1049, 0.17677669
    %v1585 = vmul.f32 %v1125, 0.17677669
    %v1586 = vmul.f32 %v1201, 0.17677669
    %v1587 = vmul.f32 %v1277, 0.17677669
    %v1588 = vmul.f32 %v1353, 0.17677669
    %v1589 = vmul.f32 %v1429, 0.17677669
    %v1590 = vmul.f32 %v1505, 0.17677669
    %v1591 = vmul.f32 %v1581, 0.17677669
    %v1592 = vlaneseq
    %v1593 = vshrl.u32 %v1592, 7
    %v1594 = vlaneseq
    %v1595 = vand.u32 %v1594, 127
    %vm1596 = vcmp.ge.s32.totalorder %v1593, %v1595
    %v1597 = vsel %vm1596, 1, 0
    %vm1598 = vcmp.eq.s32.totalorder %v1597, 1
    %v1599 = vsel %vm1598, %v1584, -inf
    %v1600 = vsel %vm1598, %v1585, -inf
    %v1601 = vsel %vm1598, %v1586, -inf
    %v1602 = vsel %vm1598, %v1587, -inf
    %v1603 = vsel %vm1598, %v1588, -inf
    %v1604 = vsel %vm1598, %v1589, -inf
    %v1605 = vsel %vm1598, %v1590, -inf
    %v1606 = vsel %vm1598, %v1591, -inf
    %v1607 = vsel %vm975, %v1599, -inf
    %1608 = vmax.xlane.f32.xlu0 %v1607
    %v1609 = vpop.xlane.xlu0 %1608
    %v1610 = vsel %vm975, %v1600, -inf
    %1611 = vmax.xlane.f32.xlu0 %v1610
    %v1612 = vpop.xlane.xlu0 %1611
    %v1613 = vsel %vm975, %v1601, -inf
    %1614 = vmax.xlane.f32.xlu0 %v1613
    %v1615 = vpop.xlane.xlu0 %1614
    %v1616 = vsel %vm975, %v1602, -inf
    %1617 = vmax.xlane.f32.xlu0 %v1616
    %v1618 = vpop.xlane.xlu0 %1617
    %v1619 = vsel %vm975, %v1603, -inf
    %1620 = vmax.xlane.f32.xlu0 %v1619
    %v1621 = vpop.xlane.xlu0 %1620
    %v1622 = vsel %vm975, %v1604, -inf
    %1623 = vmax.xlane.f32.xlu0 %v1622
    %v1624 = vpop.xlane.xlu0 %1623
    %v1625 = vsel %vm975, %v1605, -inf
    %1626 = vmax.xlane.f32.xlu0 %v1625
    %v1627 = vpop.xlane.xlu0 %1626
    %v1628 = vsel %vm975, %v1606, -inf
    %1629 = vmax.xlane.f32.xlu0 %v1628
    %v1630 = vpop.xlane.xlu0 %1629
    %v1631 = vsub.f32 %v1599, %v1609
    %v1632 = vsub.f32 %v1600, %v1612
    %v1633 = vsub.f32 %v1601, %v1615
    %v1634 = vsub.f32 %v1602, %v1618
    %v1635 = vsub.f32 %v1603, %v1621
    %v1636 = vsub.f32 %v1604, %v1624
    %v1637 = vsub.f32 %v1605, %v1627
    %v1638 = vsub.f32 %v1606, %v1630
    %v1639 = vmul.f32 %v1631, 1.442695
    %v1640 = vpow.pop %v1639
    %v1641 = vmul.f32 %v1632, 1.442695
    %v1642 = vpow.pop %v1641
    %v1643 = vmul.f32 %v1633, 1.442695
    %v1644 = vpow.pop %v1643
    %v1645 = vmul.f32 %v1634, 1.442695
    %v1646 = vpow.pop %v1645
    %v1647 = vmul.f32 %v1635, 1.442695
    %v1648 = vpow.pop %v1647
    %v1649 = vmul.f32 %v1636, 1.442695
    %v1650 = vpow.pop %v1649
    %v1651 = vmul.f32 %v1637, 1.442695
    %v1652 = vpow.pop %v1651
    %v1653 = vmul.f32 %v1638, 1.442695
    %v1654 = vpow.pop %v1653
    %v1655 = vsel %vm975, %v1640, 0.0
    %1656 = vadd.xlane.f32.xlu0 %v1655
    %v1657 = vpop.xlane.xlu0 %1656
    %v1658 = vsel %vm975, %v1642, 0.0
    %1659 = vadd.xlane.f32.xlu0 %v1658
    %v1660 = vpop.xlane.xlu0 %1659
    %v1661 = vsel %vm975, %v1644, 0.0
    %1662 = vadd.xlane.f32.xlu0 %v1661
    %v1663 = vpop.xlane.xlu0 %1662
    %v1664 = vsel %vm975, %v1646, 0.0
    %1665 = vadd.xlane.f32.xlu0 %v1664
    %v1666 = vpop.xlane.xlu0 %1665
    %v1667 = vsel %vm975, %v1648, 0.0
    %1668 = vadd.xlane.f32.xlu0 %v1667
    %v1669 = vpop.xlane.xlu0 %1668
    %v1670 = vsel %vm975, %v1650, 0.0
    %1671 = vadd.xlane.f32.xlu0 %v1670
    %v1672 = vpop.xlane.xlu0 %1671
    %v1673 = vsel %vm975, %v1652, 0.0
    %1674 = vadd.xlane.f32.xlu0 %v1673
    %v1675 = vpop.xlane.xlu0 %1674
    %v1676 = vsel %vm975, %v1654, 0.0
    %1677 = vadd.xlane.f32.xlu0 %v1676
    %v1678 = vpop.xlane.xlu0 %1677
    %v1679 = vrcp.pop %v1657
    %v1680 = vmul.f32 %v1640, %v1679
    %v1681 = vrcp.pop %v1660
    %v1682 = vmul.f32 %v1642, %v1681
    %v1683 = vrcp.pop %v1663
    %v1684 = vmul.f32 %v1644, %v1683
    %v1685 = vrcp.pop %v1666
    %v1686 = vmul.f32 %v1646, %v1685
    %v1687 = vrcp.pop %v1669
    %v1688 = vmul.f32 %v1648, %v1687
    %v1689 = vrcp.pop %v1672
    %v1690 = vmul.f32 %v1650, %v1689
    %v1691 = vrcp.pop %v1675
    %v1692 = vmul.f32 %v1652, %v1691
    %v1693 = vrcp.pop %v1678
    %v1694 = vmul.f32 %v1654, %v1693
    %v1696 = vsel %vm975, %v1680, 0
    %1698 = vmatprep.subr.mxu0 0.0
    %1699 = vmatpush1.msra.mxu0 0.0
    %1700 = vmatprep.subr.mxu0 0.0
    %1701 = vmatpush1.msra.mxu0 0.0
    %1702 = vmatprep.subr.mxu0 0.0
    %1703 = vmatpush1.msra.mxu0 0.0
    %1704 = vmatprep.subr.mxu0 0.0
    %1705 = vmatpush1.msra.mxu0 0.0
    %1706 = vmatprep.subr.mxu0 0.0
    %1707 = vmatpush1.msra.mxu0 0.0
    %1708 = vmatprep.subr.mxu0 0.0
    %1709 = vmatpush1.msra.mxu0 0.0
    %1710 = vmatprep.subr.mxu0 0.0
    %1711 = vmatpush1.msra.mxu0 0.0
    %1712 = vmatprep.subr.mxu0 0.0
    %1713 = vmatpush1.msra.mxu0 0.0
    %1714 = vmatprep.subr.mxu0 0.0
    %1715 = vmatpush1.msra.mxu0 0.0
    %1716 = vmatprep.subr.mxu0 0.0
    %1717 = vmatpush1.msra.mxu0 0.0
    %1718 = vmatprep.subr.mxu0 0.0
    %1719 = vmatpush1.msra.mxu0 0.0
    %1720 = vmatprep.subr.mxu0 0.0
    %1721 = vmatpush1.msra.mxu0 0.0
    %1722 = vmatprep.subr.mxu0 0.0
    %1723 = vmatpush1.msra.mxu0 0.0
    %1724 = vmatprep.subr.mxu0 0.0
    %1725 = vmatpush1.msra.mxu0 0.0
    %1726 = vmatprep.subr.mxu0 0.0
    %1727 = vmatpush1.msra.mxu0 0.0
    %1728 = vmatprep.subr.mxu0 0.0
    %1729 = vmatpush1.msra.mxu0 %v742
    %1730 = vmatprep.subr.mxu0 0.0
    %1731 = vmatpush2.msra.mxu0 0.0
    %1732 = vmatprep.subr.mxu0 0.0
    %1733 = vmatpush2.msra.mxu0 0.0
    %1734 = vmatprep.subr.mxu0 0.0
    %1735 = vmatpush2.msra.mxu0 0.0
    %1736 = vmatprep.subr.mxu0 0.0
    %1737 = vmatpush2.msra.mxu0 0.0
    %1738 = vmatprep.subr.mxu0 0.0
    %1739 = vmatpush2.msra.mxu0 0.0
    %1740 = vmatprep.subr.mxu0 0.0
    %1741 = vmatpush2.msra.mxu0 0.0
    %1742 = vmatprep.subr.mxu0 0.0
    %1743 = vmatpush2.msra.mxu0 0.0
    %1744 = vmatprep.subr.mxu0 0.0
    %1745 = vmatpush2.msra.mxu0 0.0
    %1746 = vmatprep.subr.mxu0 0.0
    %1747 = vmatpush2.msra.mxu0 0.0
    %1748 = vmatprep.subr.mxu0 0.0
    %1749 = vmatpush2.msra.mxu0 0.0
    %1750 = vmatprep.subr.mxu0 0.0
    %1751 = vmatpush2.msra.mxu0 0.0
    %1752 = vmatprep.subr.mxu0 0.0
    %1753 = vmatpush2.msra.mxu0 0.0
    %1754 = vmatprep.subr.mxu0 0.0
    %1755 = vmatpush2.msra.mxu0 0.0
    %1756 = vmatprep.subr.mxu0 0.0
    %1757 = vmatpush2.msra.mxu0 0.0
    %1758 = vmatprep.subr.mxu0 0.0
    %1759 = vmatpush2.msra.mxu0 0.0
    %1760 = vmatprep.subr.mxu0 0.0
    %1761 = vmatpush2.msra.mxu0 0.0
    %1762 = vmatprep.mubr.f32.mxu0 0.0
    %1763 = vmatmul.mubr.f32.gmra.mxu0 %v1696
    %v1764 = vpop.f32.mrf.mxu0
    %v1765 = vadd.f32 0.0, %v1764
    %v1766 = vpop.f32.mrf.mxu0
    %1767 = vdwg.mxu0
    %v1769 = vsel %vm975, %v1682, 0
    %1771 = vmatprep.subr.mxu0 0.0
    %1772 = vmatpush1.msra.mxu0 0.0
    %1773 = vmatprep.subr.mxu0 0.0
    %1774 = vmatpush1.msra.mxu0 0.0
    %1775 = vmatprep.subr.mxu0 0.0
    %1776 = vmatpush1.msra.mxu0 0.0
    %1777 = vmatprep.subr.mxu0 0.0
    %1778 = vmatpush1.msra.mxu0 0.0
    %1779 = vmatprep.subr.mxu0 0.0
    %1780 = vmatpush1.msra.mxu0 0.0
    %1781 = vmatprep.subr.mxu0 0.0
    %1782 = vmatpush1.msra.mxu0 0.0
    %1783 = vmatprep.subr.mxu0 0.0
    %1784 = vmatpush1.msra.mxu0 0.0
    %1785 = vmatprep.subr.mxu0 0.0
    %1786 = vmatpush1.msra.mxu0 0.0
    %1787 = vmatprep.subr.mxu0 0.0
    %1788 = vmatpush1.msra.mxu0 0.0
    %1789 = vmatprep.subr.mxu0 0.0
    %1790 = vmatpush1.msra.mxu0 0.0
    %1791 = vmatprep.subr.mxu0 0.0
    %1792 = vmatpush1.msra.mxu0 0.0
    %1793 = vmatprep.subr.mxu0 0.0
    %1794 = vmatpush1.msra.mxu0 0.0
    %1795 = vmatprep.subr.mxu0 0.0
    %1796 = vmatpush1.msra.mxu0 0.0
    %1797 = vmatprep.subr.mxu0 0.0
    %1798 = vmatpush1.msra.mxu0 0.0
    %1799 = vmatprep.subr.mxu0 0.0
    %1800 = vmatpush1.msra.mxu0 0.0
    %1801 = vmatprep.subr.mxu0 0.0
    %1802 = vmatpush1.msra.mxu0 %v747
    %1803 = vmatprep.subr.mxu0 0.0
    %1804 = vmatpush2.msra.mxu0 0.0
    %1805 = vmatprep.subr.mxu0 0.0
    %1806 = vmatpush2.msra.mxu0 0.0
    %1807 = vmatprep.subr.mxu0 0.0
    %1808 = vmatpush2.msra.mxu0 0.0
    %1809 = vmatprep.subr.mxu0 0.0
    %1810 = vmatpush2.msra.mxu0 0.0
    %1811 = vmatprep.subr.mxu0 0.0
    %1812 = vmatpush2.msra.mxu0 0.0
    %1813 = vmatprep.subr.mxu0 0.0
    %1814 = vmatpush2.msra.mxu0 0.0
    %1815 = vmatprep.subr.mxu0 0.0
    %1816 = vmatpush2.msra.mxu0 0.0
    %1817 = vmatprep.subr.mxu0 0.0
    %1818 = vmatpush2.msra.mxu0 0.0
    %1819 = vmatprep.subr.mxu0 0.0
    %1820 = vmatpush2.msra.mxu0 0.0
    %1821 = vmatprep.subr.mxu0 0.0
    %1822 = vmatpush2.msra.mxu0 0.0
    %1823 = vmatprep.subr.mxu0 0.0
    %1824 = vmatpush2.msra.mxu0 0.0
    %1825 = vmatprep.subr.mxu0 0.0
    %1826 = vmatpush2.msra.mxu0 0.0
    %1827 = vmatprep.subr.mxu0 0.0
    %1828 = vmatpush2.msra.mxu0 0.0
    %1829 = vmatprep.subr.mxu0 0.0
    %1830 = vmatpush2.msra.mxu0 0.0
    %1831 = vmatprep.subr.mxu0 0.0
    %1832 = vmatpush2.msra.mxu0 0.0
    %1833 = vmatprep.subr.mxu0 0.0
    %1834 = vmatpush2.msra.mxu0 0.0
    %1835 = vmatprep.mubr.f32.mxu0 0.0
    %1836 = vmatmul.mubr.f32.gmra.mxu0 %v1769
    %v1837 = vpop.f32.mrf.mxu0
    %v1838 = vadd.f32 0.0, %v1837
    %v1839 = vpop.f32.mrf.mxu0
    %1840 = vdwg.mxu0
    %v1842 = vsel %vm975, %v1684, 0
    %1844 = vmatprep.subr.mxu0 0.0
    %1845 = vmatpush1.msra.mxu0 0.0
    %1846 = vmatprep.subr.mxu0 0.0
    %1847 = vmatpush1.msra.mxu0 0.0
    %1848 = vmatprep.subr.mxu0 0.0
    %1849 = vmatpush1.msra.mxu0 0.0
    %1850 = vmatprep.subr.mxu0 0.0
    %1851 = vmatpush1.msra.mxu0 0.0
    %1852 = vmatprep.subr.mxu0 0.0
    %1853 = vmatpush1.msra.mxu0 0.0
    %1854 = vmatprep.subr.mxu0 0.0
    %1855 = vmatpush1.msra.mxu0 0.0
    %1856 = vmatprep.subr.mxu0 0.0
    %1857 = vmatpush1.msra.mxu0 0.0
    %1858 = vmatprep.subr.mxu0 0.0
    %1859 = vmatpush1.msra.mxu0 0.0
    %1860 = vmatprep.subr.mxu0 0.0
    %1861 = vmatpush1.msra.mxu0 0.0
    %1862 = vmatprep.subr.mxu0 0.0
    %1863 = vmatpush1.msra.mxu0 0.0
    %1864 = vmatprep.subr.mxu0 0.0
    %1865 = vmatpush1.msra.mxu0 0.0
    %1866 = vmatprep.subr.mxu0 0.0
    %1867 = vmatpush1.msra.mxu0 0.0
    %1868 = vmatprep.subr.mxu0 0.0
    %1869 = vmatpush1.msra.mxu0 0.0
    %1870 = vmatprep.subr.mxu0 0.0
    %1871 = vmatpush1.msra.mxu0 0.0
    %1872 = vmatprep.subr.mxu0 0.0
    %1873 = vmatpush1.msra.mxu0 0.0
    %1874 = vmatprep.subr.mxu0 0.0
    %1875 = vmatpush1.msra.mxu0 %v817
    %1876 = vmatprep.subr.mxu0 0.0
    %1877 = vmatpush2.msra.mxu0 0.0
    %1878 = vmatprep.subr.mxu0 0.0
    %1879 = vmatpush2.msra.mxu0 0.0
    %1880 = vmatprep.subr.mxu0 0.0
    %1881 = vmatpush2.msra.mxu0 0.0
    %1882 = vmatprep.subr.mxu0 0.0
    %1883 = vmatpush2.msra.mxu0 0.0
    %1884 = vmatprep.subr.mxu0 0.0
    %1885 = vmatpush2.msra.mxu0 0.0
    %1886 = vmatprep.subr.mxu0 0.0
    %1887 = vmatpush2.msra.mxu0 0.0
    %1888 = vmatprep.subr.mxu0 0.0
    %1889 = vmatpush2.msra.mxu0 0.0
    %1890 = vmatprep.subr.mxu0 0.0
    %1891 = vmatpush2.msra.mxu0 0.0
    %1892 = vmatprep.subr.mxu0 0.0
    %1893 = vmatpush2.msra.mxu0 0.0
    %1894 = vmatprep.subr.mxu0 0.0
    %1895 = vmatpush2.msra.mxu0 0.0
    %1896 = vmatprep.subr.mxu0 0.0
    %1897 = vmatpush2.msra.mxu0 0.0
    %1898 = vmatprep.subr.mxu0 0.0
    %1899 = vmatpush2.msra.mxu0 0.0
    %1900 = vmatprep.subr.mxu0 0.0
    %1901 = vmatpush2.msra.mxu0 0.0
    %1902 = vmatprep.subr.mxu0 0.0
    %1903 = vmatpush2.msra.mxu0 0.0
    %1904 = vmatprep.subr.mxu0 0.0
    %1905 = vmatpush2.msra.mxu0 0.0
    %1906 = vmatprep.subr.mxu0 0.0
    %1907 = vmatpush2.msra.mxu0 0.0
    %1908 = vmatprep.mubr.f32.mxu0 0.0
    %1909 = vmatmul.mubr.f32.gmra.mxu0 %v1842
    %v1910 = vpop.f32.mrf.mxu0
    %v1911 = vadd.f32 0.0, %v1910
    %v1912 = vpop.f32.mrf.mxu0
    %1913 = vdwg.mxu0
    %v1915 = vsel %vm975, %v1686, 0
    %1917 = vmatprep.subr.mxu0 0.0
    %1918 = vmatpush1.msra.mxu0 0.0
    %1919 = vmatprep.subr.mxu0 0.0
    %1920 = vmatpush1.msra.mxu0 0.0
    %1921 = vmatprep.subr.mxu0 0.0
    %1922 = vmatpush1.msra.mxu0 0.0
    %1923 = vmatprep.subr.mxu0 0.0
    %1924 = vmatpush1.msra.mxu0 0.0
    %1925 = vmatprep.subr.mxu0 0.0
    %1926 = vmatpush1.msra.mxu0 0.0
    %1927 = vmatprep.subr.mxu0 0.0
    %1928 = vmatpush1.msra.mxu0 0.0
    %1929 = vmatprep.subr.mxu0 0.0
    %1930 = vmatpush1.msra.mxu0 0.0
    %1931 = vmatprep.subr.mxu0 0.0
    %1932 = vmatpush1.msra.mxu0 0.0
    %1933 = vmatprep.subr.mxu0 0.0
    %1934 = vmatpush1.msra.mxu0 0.0
    %1935 = vmatprep.subr.mxu0 0.0
    %1936 = vmatpush1.msra.mxu0 0.0
    %1937 = vmatprep.subr.mxu0 0.0
    %1938 = vmatpush1.msra.mxu0 0.0
    %1939 = vmatprep.subr.mxu0 0.0
    %1940 = vmatpush1.msra.mxu0 0.0
    %1941 = vmatprep.subr.mxu0 0.0
    %1942 = vmatpush1.msra.mxu0 0.0
    %1943 = vmatprep.subr.mxu0 0.0
    %1944 = vmatpush1.msra.mxu0 0.0
    %1945 = vmatprep.subr.mxu0 0.0
    %1946 = vmatpush1.msra.mxu0 0.0
    %1947 = vmatprep.subr.mxu0 0.0
    %1948 = vmatpush1.msra.mxu0 %v822
    %1949 = vmatprep.subr.mxu0 0.0
    %1950 = vmatpush2.msra.mxu0 0.0
    %1951 = vmatprep.subr.mxu0 0.0
    %1952 = vmatpush2.msra.mxu0 0.0
    %1953 = vmatprep.subr.mxu0 0.0
    %1954 = vmatpush2.msra.mxu0 0.0
    %1955 = vmatprep.subr.mxu0 0.0
    %1956 = vmatpush2.msra.mxu0 0.0
    %1957 = vmatprep.subr.mxu0 0.0
    %1958 = vmatpush2.msra.mxu0 0.0
    %1959 = vmatprep.subr.mxu0 0.0
    %1960 = vmatpush2.msra.mxu0 0.0
    %1961 = vmatprep.subr.mxu0 0.0
    %1962 = vmatpush2.msra.mxu0 0.0
    %1963 = vmatprep.subr.mxu0 0.0
    %1964 = vmatpush2.msra.mxu0 0.0
    %1965 = vmatprep.subr.mxu0 0.0
    %1966 = vmatpush2.msra.mxu0 0.0
    %1967 = vmatprep.subr.mxu0 0.0
    %1968 = vmatpush2.msra.mxu0 0.0
    %1969 = vmatprep.subr.mxu0 0.0
    %1970 = vmatpush2.msra.mxu0 0.0
    %1971 = vmatprep.subr.mxu0 0.0
    %1972 = vmatpush2.msra.mxu0 0.0
    %1973 = vmatprep.subr.mxu0 0.0
    %1974 = vmatpush2.msra.mxu0 0.0
    %1975 = vmatprep.subr.mxu0 0.0
    %1976 = vmatpush2.msra.mxu0 0.0
    %1977 = vmatprep.subr.mxu0 0.0
    %1978 = vmatpush2.msra.mxu0 0.0
    %1979 = vmatprep.subr.mxu0 0.0
    %1980 = vmatpush2.msra.mxu0 0.0
    %1981 = vmatprep.mubr.f32.mxu0 0.0
    %1982 = vmatmul.mubr.f32.gmra.mxu0 %v1915
    %v1983 = vpop.f32.mrf.mxu0
    %v1984 = vadd.f32 0.0, %v1983
    %v1985 = vpop.f32.mrf.mxu0
    %1986 = vdwg.mxu0
    %v1988 = vsel %vm975, %v1688, 0
    %1990 = vmatprep.subr.mxu0 0.0
    %1991 = vmatpush1.msra.mxu0 0.0
    %1992 = vmatprep.subr.mxu0 0.0
    %1993 = vmatpush1.msra.mxu0 0.0
    %1994 = vmatprep.subr.mxu0 0.0
    %1995 = vmatpush1.msra.mxu0 0.0
    %1996 = vmatprep.subr.mxu0 0.0
    %1997 = vmatpush1.msra.mxu0 0.0
    %1998 = vmatprep.subr.mxu0 0.0
    %1999 = vmatpush1.msra.mxu0 0.0
    %2000 = vmatprep.subr.mxu0 0.0
    %2001 = vmatpush1.msra.mxu0 0.0
    %2002 = vmatprep.subr.mxu0 0.0
    %2003 = vmatpush1.msra.mxu0 0.0
    %2004 = vmatprep.subr.mxu0 0.0
    %2005 = vmatpush1.msra.mxu0 0.0
    %2006 = vmatprep.subr.mxu0 0.0
    %2007 = vmatpush1.msra.mxu0 0.0
    %2008 = vmatprep.subr.mxu0 0.0
    %2009 = vmatpush1.msra.mxu0 0.0
    %2010 = vmatprep.subr.mxu0 0.0
    %2011 = vmatpush1.msra.mxu0 0.0
    %2012 = vmatprep.subr.mxu0 0.0
    %2013 = vmatpush1.msra.mxu0 0.0
    %2014 = vmatprep.subr.mxu0 0.0
    %2015 = vmatpush1.msra.mxu0 0.0
    %2016 = vmatprep.subr.mxu0 0.0
    %2017 = vmatpush1.msra.mxu0 0.0
    %2018 = vmatprep.subr.mxu0 0.0
    %2019 = vmatpush1.msra.mxu0 0.0
    %2020 = vmatprep.subr.mxu0 0.0
    %2021 = vmatpush1.msra.mxu0 %v892
    %2022 = vmatprep.subr.mxu0 0.0
    %2023 = vmatpush2.msra.mxu0 0.0
    %2024 = vmatprep.subr.mxu0 0.0
    %2025 = vmatpush2.msra.mxu0 0.0
    %2026 = vmatprep.subr.mxu0 0.0
    %2027 = vmatpush2.msra.mxu0 0.0
    %2028 = vmatprep.subr.mxu0 0.0
    %2029 = vmatpush2.msra.mxu0 0.0
    %2030 = vmatprep.subr.mxu0 0.0
    %2031 = vmatpush2.msra.mxu0 0.0
    %2032 = vmatprep.subr.mxu0 0.0
    %2033 = vmatpush2.msra.mxu0 0.0
    %2034 = vmatprep.subr.mxu0 0.0
    %2035 = vmatpush2.msra.mxu0 0.0
    %2036 = vmatprep.subr.mxu0 0.0
    %2037 = vmatpush2.msra.mxu0 0.0
    %2038 = vmatprep.subr.mxu0 0.0
    %2039 = vmatpush2.msra.mxu0 0.0
    %2040 = vmatprep.subr.mxu0 0.0
    %2041 = vmatpush2.msra.mxu0 0.0
    %2042 = vmatprep.subr.mxu0 0.0
    %2043 = vmatpush2.msra.mxu0 0.0
    %2044 = vmatprep.subr.mxu0 0.0
    %2045 = vmatpush2.msra.mxu0 0.0
    %2046 = vmatprep.subr.mxu0 0.0
    %2047 = vmatpush2.msra.mxu0 0.0
    %2048 = vmatprep.subr.mxu0 0.0
    %2049 = vmatpush2.msra.mxu0 0.0
    %2050 = vmatprep.subr.mxu0 0.0
    %2051 = vmatpush2.msra.mxu0 0.0
    %2052 = vmatprep.subr.mxu0 0.0
    %2053 = vmatpush2.msra.mxu0 0.0
    %2054 = vmatprep.mubr.f32.mxu0 0.0
    %2055 = vmatmul.mubr.f32.gmra.mxu0 %v1988
    %v2056 = vpop.f32.mrf.mxu0
    %v2057 = vadd.f32 0.0, %v2056
    %v2058 = vpop.f32.mrf.mxu0
    %2059 = vdwg.mxu0
    %v2061 = vsel %vm975, %v1690, 0
    %2063 = vmatprep.subr.mxu0 0.0
    %2064 = vmatpush1.msra.mxu0 0.0
    %2065 = vmatprep.subr.mxu0 0.0
    %2066 = vmatpush1.msra.mxu0 0.0
    %2067 = vmatprep.subr.mxu0 0.0
    %2068 = vmatpush1.msra.mxu0 0.0
    %2069 = vmatprep.subr.mxu0 0.0
    %2070 = vmatpush1.msra.mxu0 0.0
    %2071 = vmatprep.subr.mxu0 0.0
    %2072 = vmatpush1.msra.mxu0 0.0
    %2073 = vmatprep.subr.mxu0 0.0
    %2074 = vmatpush1.msra.mxu0 0.0
    %2075 = vmatprep.subr.mxu0 0.0
    %2076 = vmatpush1.msra.mxu0 0.0
    %2077 = vmatprep.subr.mxu0 0.0
    %2078 = vmatpush1.msra.mxu0 0.0
    %2079 = vmatprep.subr.mxu0 0.0
    %2080 = vmatpush1.msra.mxu0 0.0
    %2081 = vmatprep.subr.mxu0 0.0
    %2082 = vmatpush1.msra.mxu0 0.0
    %2083 = vmatprep.subr.mxu0 0.0
    %2084 = vmatpush1.msra.mxu0 0.0
    %2085 = vmatprep.subr.mxu0 0.0
    %2086 = vmatpush1.msra.mxu0 0.0
    %2087 = vmatprep.subr.mxu0 0.0
    %2088 = vmatpush1.msra.mxu0 0.0
    %2089 = vmatprep.subr.mxu0 0.0
    %2090 = vmatpush1.msra.mxu0 0.0
    %2091 = vmatprep.subr.mxu0 0.0
    %2092 = vmatpush1.msra.mxu0 0.0
    %2093 = vmatprep.subr.mxu0 0.0
    %2094 = vmatpush1.msra.mxu0 %v897
    %2095 = vmatprep.subr.mxu0 0.0
    %2096 = vmatpush2.msra.mxu0 0.0
    %2097 = vmatprep.subr.mxu0 0.0
    %2098 = vmatpush2.msra.mxu0 0.0
    %2099 = vmatprep.subr.mxu0 0.0
    %2100 = vmatpush2.msra.mxu0 0.0
    %2101 = vmatprep.subr.mxu0 0.0
    %2102 = vmatpush2.msra.mxu0 0.0
    %2103 = vmatprep.subr.mxu0 0.0
    %2104 = vmatpush2.msra.mxu0 0.0
    %2105 = vmatprep.subr.mxu0 0.0
    %2106 = vmatpush2.msra.mxu0 0.0
    %2107 = vmatprep.subr.mxu0 0.0
    %2108 = vmatpush2.msra.mxu0 0.0
    %2109 = vmatprep.subr.mxu0 0.0
    %2110 = vmatpush2.msra.mxu0 0.0
    %2111 = vmatprep.subr.mxu0 0.0
    %2112 = vmatpush2.msra.mxu0 0.0
    %2113 = vmatprep.subr.mxu0 0.0
    %2114 = vmatpush2.msra.mxu0 0.0
    %2115 = vmatprep.subr.mxu0 0.0
    %2116 = vmatpush2.msra.mxu0 0.0
    %2117 = vmatprep.subr.mxu0 0.0
    %2118 = vmatpush2.msra.mxu0 0.0
    %2119 = vmatprep.subr.mxu0 0.0
    %2120 = vmatpush2.msra.mxu0 0.0
    %2121 = vmatprep.subr.mxu0 0.0
    %2122 = vmatpush2.msra.mxu0 0.0
    %2123 = vmatprep.subr.mxu0 0.0
    %2124 = vmatpush2.msra.mxu0 0.0
    %2125 = vmatprep.subr.mxu0 0.0
    %2126 = vmatpush2.msra.mxu0 0.0
    %2127 = vmatprep.mubr.f32.mxu0 0.0
    %2128 = vmatmul.mubr.f32.gmra.mxu0 %v2061
    %v2129 = vpop.f32.mrf.mxu0
    %v2130 = vadd.f32 0.0, %v2129
    %v2131 = vpop.f32.mrf.mxu0
    %2132 = vdwg.mxu0
    %v2134 = vsel %vm975, %v1692, 0
    %2136 = vmatprep.subr.mxu0 0.0
    %2137 = vmatpush1.msra.mxu0 0.0
    %2138 = vmatprep.subr.mxu0 0.0
    %2139 = vmatpush1.msra.mxu0 0.0
    %2140 = vmatprep.subr.mxu0 0.0
    %2141 = vmatpush1.msra.mxu0 0.0
    %2142 = vmatprep.subr.mxu0 0.0
    %2143 = vmatpush1.msra.mxu0 0.0
    %2144 = vmatprep.subr.mxu0 0.0
    %2145 = vmatpush1.msra.mxu0 0.0
    %2146 = vmatprep.subr.mxu0 0.0
    %2147 = vmatpush1.msra.mxu0 0.0
    %2148 = vmatprep.subr.mxu0 0.0
    %2149 = vmatpush1.msra.mxu0 0.0
    %2150 = vmatprep.subr.mxu0 0.0
    %2151 = vmatpush1.msra.mxu0 0.0
    %2152 = vmatprep.subr.mxu0 0.0
    %2153 = vmatpush1.msra.mxu0 0.0
    %2154 = vmatprep.subr.mxu0 0.0
    %2155 = vmatpush1.msra.mxu0 0.0
    %2156 = vmatprep.subr.mxu0 0.0
    %2157 = vmatpush1.msra.mxu0 0.0
    %2158 = vmatprep.subr.mxu0 0.0
    %2159 = vmatpush1.msra.mxu0 0.0
    %2160 = vmatprep.subr.mxu0 0.0
    %2161 = vmatpush1.msra.mxu0 0.0
    %2162 = vmatprep.subr.mxu0 0.0
    %2163 = vmatpush1.msra.mxu0 0.0
    %2164 = vmatprep.subr.mxu0 0.0
    %2165 = vmatpush1.msra.mxu0 0.0
    %2166 = vmatprep.subr.mxu0 0.0
    %2167 = vmatpush1.msra.mxu0 %v967
    %2168 = vmatprep.subr.mxu0 0.0
    %2169 = vmatpush2.msra.mxu0 0.0
    %2170 = vmatprep.subr.mxu0 0.0
    %2171 = vmatpush2.msra.mxu0 0.0
    %2172 = vmatprep.subr.mxu0 0.0
    %2173 = vmatpush2.msra.mxu0 0.0
    %2174 = vmatprep.subr.mxu0 0.0
    %2175 = vmatpush2.msra.mxu0 0.0
    %2176 = vmatprep.subr.mxu0 0.0
    %2177 = vmatpush2.msra.mxu0 0.0
    %2178 = vmatprep.subr.mxu0 0.0
    %2179 = vmatpush2.msra.mxu0 0.0
    %2180 = vmatprep.subr.mxu0 0.0
    %2181 = vmatpush2.msra.mxu0 0.0
    %2182 = vmatprep.subr.mxu0 0.0
    %2183 = vmatpush2.msra.mxu0 0.0
    %2184 = vmatprep.subr.mxu0 0.0
    %2185 = vmatpush2.msra.mxu0 0.0
    %2186 = vmatprep.subr.mxu0 0.0
    %2187 = vmatpush2.msra.mxu0 0.0
    %2188 = vmatprep.subr.mxu0 0.0
    %2189 = vmatpush2.msra.mxu0 0.0
    %2190 = vmatprep.subr.mxu0 0.0
    %2191 = vmatpush2.msra.mxu0 0.0
    %2192 = vmatprep.subr.mxu0 0.0
    %2193 = vmatpush2.msra.mxu0 0.0
    %2194 = vmatprep.subr.mxu0 0.0
    %2195 = vmatpush2.msra.mxu0 0.0
    %2196 = vmatprep.subr.mxu0 0.0
    %2197 = vmatpush2.msra.mxu0 0.0
    %2198 = vmatprep.subr.mxu0 0.0
    %2199 = vmatpush2.msra.mxu0 0.0
    %2200 = vmatprep.mubr.f32.mxu0 0.0
    %2201 = vmatmul.mubr.f32.gmra.mxu0 %v2134
    %v2202 = vpop.f32.mrf.mxu0
    %v2203 = vadd.f32 0.0, %v2202
    %v2204 = vpop.f32.mrf.mxu0
    %2205 = vdwg.mxu0
    %v2207 = vsel %vm975, %v1694, 0
    %2209 = vmatprep.subr.mxu0 0.0
    %2210 = vmatpush1.msra.mxu0 0.0
    %2211 = vmatprep.subr.mxu0 0.0
    %2212 = vmatpush1.msra.mxu0 0.0
    %2213 = vmatprep.subr.mxu0 0.0
    %2214 = vmatpush1.msra.mxu0 0.0
    %2215 = vmatprep.subr.mxu0 0.0
    %2216 = vmatpush1.msra.mxu0 0.0
    %2217 = vmatprep.subr.mxu0 0.0
    %2218 = vmatpush1.msra.mxu0 0.0
    %2219 = vmatprep.subr.mxu0 0.0
    %2220 = vmatpush1.msra.mxu0 0.0
    %2221 = vmatprep.subr.mxu0 0.0
    %2222 = vmatpush1.msra.mxu0 0.0
    %2223 = vmatprep.subr.mxu0 0.0
    %2224 = vmatpush1.msra.mxu0 0.0
    %2225 = vmatprep.subr.mxu0 0.0
    %2226 = vmatpush1.msra.mxu0 0.0
    %2227 = vmatprep.subr.mxu0 0.0
    %2228 = vmatpush1.msra.mxu0 0.0
    %2229 = vmatprep.subr.mxu0 0.0
    %2230 = vmatpush1.msra.mxu0 0.0
    %2231 = vmatprep.subr.mxu0 0.0
    %2232 = vmatpush1.msra.mxu0 0.0
    %2233 = vmatprep.subr.mxu0 0.0
    %2234 = vmatpush1.msra.mxu0 0.0
    %2235 = vmatprep.subr.mxu0 0.0
    %2236 = vmatpush1.msra.mxu0 0.0
    %2237 = vmatprep.subr.mxu0 0.0
    %2238 = vmatpush1.msra.mxu0 0.0
    %2239 = vmatprep.subr.mxu0 0.0
    %2240 = vmatpush1.msra.mxu0 %v972
    %2241 = vmatprep.subr.mxu0 0.0
    %2242 = vmatpush2.msra.mxu0 0.0
    %2243 = vmatprep.subr.mxu0 0.0
    %2244 = vmatpush2.msra.mxu0 0.0
    %2245 = vmatprep.subr.mxu0 0.0
    %2246 = vmatpush2.msra.mxu0 0.0
    %2247 = vmatprep.subr.mxu0 0.0
    %2248 = vmatpush2.msra.mxu0 0.0
    %2249 = vmatprep.subr.mxu0 0.0
    %2250 = vmatpush2.msra.mxu0 0.0
    %2251 = vmatprep.subr.mxu0 0.0
    %2252 = vmatpush2.msra.mxu0 0.0
    %2253 = vmatprep.subr.mxu0 0.0
    %2254 = vmatpush2.msra.mxu0 0.0
    %2255 = vmatprep.subr.mxu0 0.0
    %2256 = vmatpush2.msra.mxu0 0.0
    %2257 = vmatprep.subr.mxu0 0.0
    %2258 = vmatpush2.msra.mxu0 0.0
    %2259 = vmatprep.subr.mxu0 0.0
    %2260 = vmatpush2.msra.mxu0 0.0
    %2261 = vmatprep.subr.mxu0 0.0
    %2262 = vmatpush2.msra.mxu0 0.0
    %2263 = vmatprep.subr.mxu0 0.0
    %2264 = vmatpush2.msra.mxu0 0.0
    %2265 = vmatprep.subr.mxu0 0.0
    %2266 = vmatpush2.msra.mxu0 0.0
    %2267 = vmatprep.subr.mxu0 0.0
    %2268 = vmatpush2.msra.mxu0 0.0
    %2269 = vmatprep.subr.mxu0 0.0
    %2270 = vmatpush2.msra.mxu0 0.0
    %2271 = vmatprep.subr.mxu0 0.0
    %2272 = vmatpush2.msra.mxu0 0.0
    %2273 = vmatprep.mubr.f32.mxu0 0.0
    %2274 = vmatmul.mubr.f32.gmra.mxu0 %v2207
    %v2275 = vpop.f32.mrf.mxu0
    %v2276 = vadd.f32 0.0, %v2275
    %v2277 = vpop.f32.mrf.mxu0
    %2278 = vdwg.mxu0
    %v2279 = vld [vmem:[%s2] sm:$0xff]
    %v2280 = vld [vmem:[%s2 + $0x8] sm:$0xff]
    %v2281 = vld [vmem:[%s2 + $0x10] sm:$0xff]
    %v2282 = vld [vmem:[%s2 + $0x18] sm:$0xff]
    %v2284 = vsel %vm975, %v1765, 0
    %v2287 = vsel %vm975, %v1838, 0
    %2289 = vmatprep.subr.mxu0 0.0
    %2290 = vmatpush1.msra.mxu0 0.0
    %2291 = vmatprep.subr.mxu0 0.0
    %2292 = vmatpush1.msra.mxu0 0.0
    %2293 = vmatprep.subr.mxu0 0.0
    %2294 = vmatpush1.msra.mxu0 0.0
    %2295 = vmatprep.subr.mxu0 0.0
    %2296 = vmatpush1.msra.mxu0 0.0
    %2297 = vmatprep.subr.mxu0 0.0
    %2298 = vmatpush1.msra.mxu0 0.0
    %2299 = vmatprep.subr.mxu0 0.0
    %2300 = vmatpush1.msra.mxu0 0.0
    %2301 = vmatprep.subr.mxu0 0.0
    %2302 = vmatpush1.msra.mxu0 0.0
    %2303 = vmatprep.subr.mxu0 0.0
    %2304 = vmatpush1.msra.mxu0 0.0
    %2305 = vmatprep.subr.mxu0 0.0
    %2306 = vmatpush1.msra.mxu0 0.0
    %2307 = vmatprep.subr.mxu0 0.0
    %2308 = vmatpush1.msra.mxu0 0.0
    %2309 = vmatprep.subr.mxu0 0.0
    %2310 = vmatpush1.msra.mxu0 0.0
    %2311 = vmatprep.subr.mxu0 0.0
    %2312 = vmatpush1.msra.mxu0 0.0
    %2313 = vmatprep.subr.mxu0 0.0
    %2314 = vmatpush1.msra.mxu0 0.0
    %2315 = vmatprep.subr.mxu0 0.0
    %2316 = vmatpush1.msra.mxu0 0.0
    %2317 = vmatprep.subr.mxu0 0.0
    %2318 = vmatpush1.msra.mxu0 0.0
    %2319 = vmatprep.subr.mxu0 0.0
    %2320 = vmatpush1.msra.mxu0 %v2279
    %2321 = vmatprep.subr.mxu0 0.0
    %2322 = vmatpush2.msra.mxu0 0.0
    %2323 = vmatprep.subr.mxu0 0.0
    %2324 = vmatpush2.msra.mxu0 0.0
    %2325 = vmatprep.subr.mxu0 0.0
    %2326 = vmatpush2.msra.mxu0 0.0
    %2327 = vmatprep.subr.mxu0 0.0
    %2328 = vmatpush2.msra.mxu0 0.0
    %2329 = vmatprep.subr.mxu0 0.0
    %2330 = vmatpush2.msra.mxu0 0.0
    %2331 = vmatprep.subr.mxu0 0.0
    %2332 = vmatpush2.msra.mxu0 0.0
    %2333 = vmatprep.subr.mxu0 0.0
    %2334 = vmatpush2.msra.mxu0 0.0
    %2335 = vmatprep.subr.mxu0 0.0
    %2336 = vmatpush2.msra.mxu0 0.0
    %2337 = vmatprep.subr.mxu0 0.0
    %2338 = vmatpush2.msra.mxu0 0.0
    %2339 = vmatprep.subr.mxu0 0.0
    %2340 = vmatpush2.msra.mxu0 0.0
    %2341 = vmatprep.subr.mxu0 0.0
    %2342 = vmatpush2.msra.mxu0 0.0
    %2343 = vmatprep.subr.mxu0 0.0
    %2344 = vmatpush2.msra.mxu0 0.0
    %2345 = vmatprep.subr.mxu0 0.0
    %2346 = vmatpush2.msra.mxu0 0.0
    %2347 = vmatprep.subr.mxu0 0.0
    %2348 = vmatpush2.msra.mxu0 0.0
    %2349 = vmatprep.subr.mxu0 0.0
    %2350 = vmatpush2.msra.mxu0 0.0
    %2351 = vmatprep.subr.mxu0 0.0
    %2352 = vmatpush2.msra.mxu0 0.0
    %2353 = vmatprep.mubr.f32.mxu0 0.0
    %2354 = vmatmul.mubr.f32.gmra.mxu0 %v2284
    %v2355 = vpop.f32.mrf.mxu0
    %v2356 = vadd.f32 0.0, %v2355
    %v2357 = vpop.f32.mrf.mxu0
    %2358 = vmatprep.mubr.f32.mxu0 0.0
    %2359 = vmatmul.mubr.f32.gmra.mxu0 %v2287
    %v2360 = vpop.f32.mrf.mxu0
    %v2361 = vadd.f32 0.0, %v2360
    %v2362 = vpop.f32.mrf.mxu0
    %2363 = vdwg.mxu0
    %v2365 = vsel %vm975, %v1911, 0
    %v2368 = vsel %vm975, %v1984, 0
    %2370 = vmatprep.subr.mxu0 0.0
    %2371 = vmatpush1.msra.mxu0 0.0
    %2372 = vmatprep.subr.mxu0 0.0
    %2373 = vmatpush1.msra.mxu0 0.0
    %2374 = vmatprep.subr.mxu0 0.0
    %2375 = vmatpush1.msra.mxu0 0.0
    %2376 = vmatprep.subr.mxu0 0.0
    %2377 = vmatpush1.msra.mxu0 0.0
    %2378 = vmatprep.subr.mxu0 0.0
    %2379 = vmatpush1.msra.mxu0 0.0
    %2380 = vmatprep.subr.mxu0 0.0
    %2381 = vmatpush1.msra.mxu0 0.0
    %2382 = vmatprep.subr.mxu0 0.0
    %2383 = vmatpush1.msra.mxu0 0.0
    %2384 = vmatprep.subr.mxu0 0.0
    %2385 = vmatpush1.msra.mxu0 0.0
    %2386 = vmatprep.subr.mxu0 0.0
    %2387 = vmatpush1.msra.mxu0 0.0
    %2388 = vmatprep.subr.mxu0 0.0
    %2389 = vmatpush1.msra.mxu0 0.0
    %2390 = vmatprep.subr.mxu0 0.0
    %2391 = vmatpush1.msra.mxu0 0.0
    %2392 = vmatprep.subr.mxu0 0.0
    %2393 = vmatpush1.msra.mxu0 0.0
    %2394 = vmatprep.subr.mxu0 0.0
    %2395 = vmatpush1.msra.mxu0 0.0
    %2396 = vmatprep.subr.mxu0 0.0
    %2397 = vmatpush1.msra.mxu0 0.0
    %2398 = vmatprep.subr.mxu0 0.0
    %2399 = vmatpush1.msra.mxu0 0.0
    %2400 = vmatprep.subr.mxu0 0.0
    %2401 = vmatpush1.msra.mxu0 %v2280
    %2402 = vmatprep.subr.mxu0 0.0
    %2403 = vmatpush2.msra.mxu0 0.0
    %2404 = vmatprep.subr.mxu0 0.0
    %2405 = vmatpush2.msra.mxu0 0.0
    %2406 = vmatprep.subr.mxu0 0.0
    %2407 = vmatpush2.msra.mxu0 0.0
    %2408 = vmatprep.subr.mxu0 0.0
    %2409 = vmatpush2.msra.mxu0 0.0
    %2410 = vmatprep.subr.mxu0 0.0
    %2411 = vmatpush2.msra.mxu0 0.0
    %2412 = vmatprep.subr.mxu0 0.0
    %2413 = vmatpush2.msra.mxu0 0.0
    %2414 = vmatprep.subr.mxu0 0.0
    %2415 = vmatpush2.msra.mxu0 0.0
    %2416 = vmatprep.subr.mxu0 0.0
    %2417 = vmatpush2.msra.mxu0 0.0
    %2418 = vmatprep.subr.mxu0 0.0
    %2419 = vmatpush2.msra.mxu0 0.0
    %2420 = vmatprep.subr.mxu0 0.0
    %2421 = vmatpush2.msra.mxu0 0.0
    %2422 = vmatprep.subr.mxu0 0.0
    %2423 = vmatpush2.msra.mxu0 0.0
    %2424 = vmatprep.subr.mxu0 0.0
    %2425 = vmatpush2.msra.mxu0 0.0
    %2426 = vmatprep.subr.mxu0 0.0
    %2427 = vmatpush2.msra.mxu0 0.0
    %2428 = vmatprep.subr.mxu0 0.0
    %2429 = vmatpush2.msra.mxu0 0.0
    %2430 = vmatprep.subr.mxu0 0.0
    %2431 = vmatpush2.msra.mxu0 0.0
    %2432 = vmatprep.subr.mxu0 0.0
    %2433 = vmatpush2.msra.mxu0 0.0
    %2434 = vmatprep.mubr.f32.mxu0 0.0
    %2435 = vmatmul.mubr.f32.gmra.mxu0 %v2365
    %v2436 = vpop.f32.mrf.mxu0
    %v2437 = vadd.f32 0.0, %v2436
    %v2438 = vpop.f32.mrf.mxu0
    %2439 = vmatprep.mubr.f32.mxu0 0.0
    %2440 = vmatmul.mubr.f32.gmra.mxu0 %v2368
    %v2441 = vpop.f32.mrf.mxu0
    %v2442 = vadd.f32 0.0, %v2441
    %v2443 = vpop.f32.mrf.mxu0
    %2444 = vdwg.mxu0
    %v2446 = vsel %vm975, %v2057, 0
    %v2449 = vsel %vm975, %v2130, 0
    %2451 = vmatprep.subr.mxu0 0.0
    %2452 = vmatpush1.msra.mxu0 0.0
    %2453 = vmatprep.subr.mxu0 0.0
    %2454 = vmatpush1.msra.mxu0 0.0
    %2455 = vmatprep.subr.mxu0 0.0
    %2456 = vmatpush1.msra.mxu0 0.0
    %2457 = vmatprep.subr.mxu0 0.0
    %2458 = vmatpush1.msra.mxu0 0.0
    %2459 = vmatprep.subr.mxu0 0.0
    %2460 = vmatpush1.msra.mxu0 0.0
    %2461 = vmatprep.subr.mxu0 0.0
    %2462 = vmatpush1.msra.mxu0 0.0
    %2463 = vmatprep.subr.mxu0 0.0
    %2464 = vmatpush1.msra.mxu0 0.0
    %2465 = vmatprep.subr.mxu0 0.0
    %2466 = vmatpush1.msra.mxu0 0.0
    %2467 = vmatprep.subr.mxu0 0.0
    %2468 = vmatpush1.msra.mxu0 0.0
    %2469 = vmatprep.subr.mxu0 0.0
    %2470 = vmatpush1.msra.mxu0 0.0
    %2471 = vmatprep.subr.mxu0 0.0
    %2472 = vmatpush1.msra.mxu0 0.0
    %2473 = vmatprep.subr.mxu0 0.0
    %2474 = vmatpush1.msra.mxu0 0.0
    %2475 = vmatprep.subr.mxu0 0.0
    %2476 = vmatpush1.msra.mxu0 0.0
    %2477 = vmatprep.subr.mxu0 0.0
    %2478 = vmatpush1.msra.mxu0 0.0
    %2479 = vmatprep.subr.mxu0 0.0
    %2480 = vmatpush1.msra.mxu0 0.0
    %2481 = vmatprep.subr.mxu0 0.0
    %2482 = vmatpush1.msra.mxu0 %v2281
    %2483 = vmatprep.subr.mxu0 0.0
    %2484 = vmatpush2.msra.mxu0 0.0
    %2485 = vmatprep.subr.mxu0 0.0
    %2486 = vmatpush2.msra.mxu0 0.0
    %2487 = vmatprep.subr.mxu0 0.0
    %2488 = vmatpush2.msra.mxu0 0.0
    %2489 = vmatprep.subr.mxu0 0.0
    %2490 = vmatpush2.msra.mxu0 0.0
    %2491 = vmatprep.subr.mxu0 0.0
    %2492 = vmatpush2.msra.mxu0 0.0
    %2493 = vmatprep.subr.mxu0 0.0
    %2494 = vmatpush2.msra.mxu0 0.0
    %2495 = vmatprep.subr.mxu0 0.0
    %2496 = vmatpush2.msra.mxu0 0.0
    %2497 = vmatprep.subr.mxu0 0.0
    %2498 = vmatpush2.msra.mxu0 0.0
    %2499 = vmatprep.subr.mxu0 0.0
    %2500 = vmatpush2.msra.mxu0 0.0
    %2501 = vmatprep.subr.mxu0 0.0
    %2502 = vmatpush2.msra.mxu0 0.0
    %2503 = vmatprep.subr.mxu0 0.0
    %2504 = vmatpush2.msra.mxu0 0.0
    %2505 = vmatprep.subr.mxu0 0.0
    %2506 = vmatpush2.msra.mxu0 0.0
    %2507 = vmatprep.subr.mxu0 0.0
    %2508 = vmatpush2.msra.mxu0 0.0
    %2509 = vmatprep.subr.mxu0 0.0
    %2510 = vmatpush2.msra.mxu0 0.0
    %2511 = vmatprep.subr.mxu0 0.0
    %2512 = vmatpush2.msra.mxu0 0.0
    %2513 = vmatprep.subr.mxu0 0.0
    %2514 = vmatpush2.msra.mxu0 0.0
    %2515 = vmatprep.mubr.f32.mxu0 0.0
    %2516 = vmatmul.mubr.f32.gmra.mxu0 %v2446
    %v2517 = vpop.f32.mrf.mxu0
    %v2518 = vadd.f32 0.0, %v2517
    %v2519 = vpop.f32.mrf.mxu0
    %2520 = vmatprep.mubr.f32.mxu0 0.0
    %2521 = vmatmul.mubr.f32.gmra.mxu0 %v2449
    %v2522 = vpop.f32.mrf.mxu0
    %v2523 = vadd.f32 0.0, %v2522
    %v2524 = vpop.f32.mrf.mxu0
    %2525 = vdwg.mxu0
    %v2527 = vsel %vm975, %v2203, 0
    %v2530 = vsel %vm975, %v2276, 0
    %2532 = vmatprep.subr.mxu0 0.0
    %2533 = vmatpush1.msra.mxu0 0.0
    %2534 = vmatprep.subr.mxu0 0.0
    %2535 = vmatpush1.msra.mxu0 0.0
    %2536 = vmatprep.subr.mxu0 0.0
    %2537 = vmatpush1.msra.mxu0 0.0
    %2538 = vmatprep.subr.mxu0 0.0
    %2539 = vmatpush1.msra.mxu0 0.0
    %2540 = vmatprep.subr.mxu0 0.0
    %2541 = vmatpush1.msra.mxu0 0.0
    %2542 = vmatprep.subr.mxu0 0.0
    %2543 = vmatpush1.msra.mxu0 0.0
    %2544 = vmatprep.subr.mxu0 0.0
    %2545 = vmatpush1.msra.mxu0 0.0
    %2546 = vmatprep.subr.mxu0 0.0
    %2547 = vmatpush1.msra.mxu0 0.0
    %2548 = vmatprep.subr.mxu0 0.0
    %2549 = vmatpush1.msra.mxu0 0.0
    %2550 = vmatprep.subr.mxu0 0.0
    %2551 = vmatpush1.msra.mxu0 0.0
    %2552 = vmatprep.subr.mxu0 0.0
    %2553 = vmatpush1.msra.mxu0 0.0
    %2554 = vmatprep.subr.mxu0 0.0
    %2555 = vmatpush1.msra.mxu0 0.0
    %2556 = vmatprep.subr.mxu0 0.0
    %2557 = vmatpush1.msra.mxu0 0.0
    %2558 = vmatprep.subr.mxu0 0.0
    %2559 = vmatpush1.msra.mxu0 0.0
    %2560 = vmatprep.subr.mxu0 0.0
    %2561 = vmatpush1.msra.mxu0 0.0
    %2562 = vmatprep.subr.mxu0 0.0
    %2563 = vmatpush1.msra.mxu0 %v2282
    %2564 = vmatprep.subr.mxu0 0.0
    %2565 = vmatpush2.msra.mxu0 0.0
    %2566 = vmatprep.subr.mxu0 0.0
    %2567 = vmatpush2.msra.mxu0 0.0
    %2568 = vmatprep.subr.mxu0 0.0
    %2569 = vmatpush2.msra.mxu0 0.0
    %2570 = vmatprep.subr.mxu0 0.0
    %2571 = vmatpush2.msra.mxu0 0.0
    %2572 = vmatprep.subr.mxu0 0.0
    %2573 = vmatpush2.msra.mxu0 0.0
    %2574 = vmatprep.subr.mxu0 0.0
    %2575 = vmatpush2.msra.mxu0 0.0
    %2576 = vmatprep.subr.mxu0 0.0
    %2577 = vmatpush2.msra.mxu0 0.0
    %2578 = vmatprep.subr.mxu0 0.0
    %2579 = vmatpush2.msra.mxu0 0.0
    %2580 = vmatprep.subr.mxu0 0.0
    %2581 = vmatpush2.msra.mxu0 0.0
    %2582 = vmatprep.subr.mxu0 0.0
    %2583 = vmatpush2.msra.mxu0 0.0
    %2584 = vmatprep.subr.mxu0 0.0
    %2585 = vmatpush2.msra.mxu0 0.0
    %2586 = vmatprep.subr.mxu0 0.0
    %2587 = vmatpush2.msra.mxu0 0.0
    %2588 = vmatprep.subr.mxu0 0.0
    %2589 = vmatpush2.msra.mxu0 0.0
    %2590 = vmatprep.subr.mxu0 0.0
    %2591 = vmatpush2.msra.mxu0 0.0
    %2592 = vmatprep.subr.mxu0 0.0
    %2593 = vmatpush2.msra.mxu0 0.0
    %2594 = vmatprep.subr.mxu0 0.0
    %2595 = vmatpush2.msra.mxu0 0.0
    %2596 = vmatprep.mubr.f32.mxu0 0.0
    %2597 = vmatmul.mubr.f32.gmra.mxu0 %v2527
    %v2598 = vpop.f32.mrf.mxu0
    %v2599 = vadd.f32 0.0, %v2598
    %v2600 = vpop.f32.mrf.mxu0
    %2601 = vmatprep.mubr.f32.mxu0 0.0
    %2602 = vmatmul.mubr.f32.gmra.mxu0 %v2530
    %v2603 = vpop.f32.mrf.mxu0
    %v2604 = vadd.f32 0.0, %v2603
    %v2605 = vpop.f32.mrf.mxu0
    %2606 = vdwg.mxu0
    %v2607 = vsel %vm68, %v2356, 0.0
    %v2608 = vsel %vm68, %v2437, 0.0
    %v2609 = vadd.f32 %v2607, %v2608
    %v2610 = vsel %vm68, %v2518, 0.0
    %v2611 = vadd.f32 %v2609, %v2610
    %v2612 = vsel %vm68, %v2599, 0.0
    %v2613 = vadd.f32 %v2611, %v2612
    %v2614 = vsel %vm68, %v2361, 0.0
    %v2615 = vsel %vm68, %v2442, 0.0
    %v2616 = vadd.f32 %v2614, %v2615
    %v2617 = vsel %vm68, %v2523, 0.0
    %v2618 = vadd.f32 %v2616, %v2617
    %v2619 = vsel %vm68, %v2604, 0.0
    %v2620 = vadd.f32 %v2618, %v2619
    %v2621 = vld [vmem:[%s3] sm:$0x1]
    %v2623 = vlaneseq
    %v2624 = vshrl.u32 %v2623, 7
    %v2625 = vsub.s32 0, %v2624
    %v2626 = vrot.slane %v2621, %v2625
    %v2628 = vadd.f32 %v2613, %v2626
    %v2629 = vadd.f32 %v2620, %v2626
    %2630 = vst.msk [vmem:[#allocation2] sm:$0xff] %vm68, %v2628
    %2631 = vst.msk [vmem:[#allocation2 + $0x8] sm:$0xff] %vm68, %v2629
    // Predicated region
    $region18: #{multi_head_attention.1} parent=1 // pred_check
      _
    $region19: #{multi_head_attention.1} parent=1 // pred_check_branch
      %2633 = sbr.rel (0) target = $region21
    $region20: #{multi_head_attention.1} parent=1 // pred_region
      %s2635 = ssub.s32 256, 256
      %2636 = vsyncadd [#allocation3], %s2635
      %s2637 = sshll.u32 [#allocation2], 4
      %s2638 = int_to_ptr.vmem [resolvable:$true] %s2637
      %2643 = dma.vmem_to_hbm [thread:$0]  %s2638, 256, %s4, [#allocation3], 128, 128, 8
    $region21: #{multi_head_attention.1} parent=1 // pred_fallthru
      _
    // Predicated region
    $region22: #{multi_head_attention.1} parent=1 // pred_check
      _
    $region23: #{multi_head_attention.1} parent=1 // pred_check_branch
      %2645 = sbr.rel (0) target = $region25
    $region24: #{multi_head_attention.1} parent=1 // pred_region
      %2646 = dma.done [#allocation3], 256
    $region25: #{multi_head_attention.1} parent=1 // pred_fallthru
      _
    %2647 = vsyncpa [#allocation3], 1

</llo_original>
